<compile_context>
chip_gen: v6e
topology: v6e:2x2x1
jax: 0.10.0
libtpu: 0.0.40
codegen_flags: <defaults>
</compile_context>

<pallas_src>
import jax
import jax.numpy as jnp
from jax.experimental import pallas as pl
from jax.experimental.pallas import tpu as pltpu

LANE = 128
SUBLANE = 16  # bf16-native sublane packing; batch padding granularity


def _round_up(n, m):
    return ((n + m - 1) // m) * m


def _exp_and_rowsum(h):
    """Unnormalized, numerically-stable softmax numerator + denominator.

    p = exp(h - max(h)) in bf16 (MXU-ready, bf16 EUP on v6e/v7x), row-sum
    accumulated in f32.  The caller folds the 1/sum scale in *after* the next
    matmul (scale commutes with the row-wise matmul), so the full-width
    normalize multiply never happens.
    """
    m = jnp.max(h, axis=-1, keepdims=True)
    p = jnp.exp((h - m).astype(jnp.bfloat16))
    s = jnp.sum(p.astype(jnp.float32), axis=-1, keepdims=True)
    return p, s


def regression_mlp_kernel(x_ref,
                          w1_ref, b1_ref,
                          w2_ref, b2_ref,
                          w3_ref, b3_ref,
                          w4_ref, b4_ref,
                          o_ref):
    # Layer 1: x and weights are already bf16; accumulate in f32.
    h = jnp.dot(x_ref[...], w1_ref[...],
                preferred_element_type=jnp.float32) + b1_ref[...]

    # softmax -> fc2, with normalization deferred past the matmul.
    p, s = _exp_and_rowsum(h)
    h = (jnp.dot(p, w2_ref[...], preferred_element_type=jnp.float32)
         * pl.reciprocal(s, approx=True)) + b2_ref[...]

    # softmax -> fc3
    p, s = _exp_and_rowsum(h)
    h = (jnp.dot(p, w3_ref[...], preferred_element_type=jnp.float32)
         * pl.reciprocal(s, approx=True)) + b3_ref[...]

    # softmax -> fc4 (no softmax after fc4)
    p, s = _exp_and_rowsum(h)
    h = (jnp.dot(p, w4_ref[...], preferred_element_type=jnp.float32)
         * pl.reciprocal(s, approx=True)) + b4_ref[...]

    o_ref[...] = h.astype(o_ref.dtype)


def regression_network(x, params, *, batch_tile=512):
    """Fused forward pass. x: (B, input_size) f32, params: dict of w1..b4."""
    B, in_dim = x.shape
    w1, b1 = params["w1"], params["b1"]
    w2, b2 = params["w2"], params["b2"]
    w3, b3 = params["w3"], params["b3"]
    w4, b4 = params["w4"], params["b4"]
    out_dim = w4.shape[1]

    # Lane-dense output: pad the last layer's output dim to a multiple of 128
    # (zero columns, sliced off below) so stores are unmasked vst.
    out_pad = _round_up(out_dim, LANE)
    if out_pad != out_dim:
        w4 = jnp.pad(w4, ((0, 0), (0, out_pad - out_dim)))
        b4 = jnp.pad(b4, ((0, 0), (0, out_pad - out_dim)))

    # bf16 MXU operands (weights AND input); biases stay f32 (added after
    # the f32 accumulation).
    w1, w2, w3, w4 = (w.astype(jnp.bfloat16) for w in (w1, w2, w3, w4))
    x = x.astype(jnp.bfloat16)

    # Batch tiling:
    #   * pad B up to a 16-row multiple (bf16 sublane packing; padded zero
    #     rows are row-independent junk, sliced off below),
    #   * tile no larger than the padded batch,
    #   * force >= 2 grid steps when possible so "parallel" actually feeds
    #     both v7x TensorCores.
    b16 = _round_up(B, SUBLANE)
    bt = min(batch_tile, b16)
    if _round_up(b16, bt) // bt < 2 and b16 >= 2 * SUBLANE:
        bt = _round_up((b16 + 1) // 2, SUBLANE)
    b_pad = _round_up(b16, bt)
    if b_pad != B:
        x = jnp.pad(x, ((0, b_pad - B), (0, 0)))

    def resident(arr):
        # Grid-invariant block: same block index every step, so Pallas skips
        # the re-fetch after step 0 and the weights stay VMEM-resident.
        # Working set at bt=512: ~2.8 MB double-buffered bf16 weights +
        # ~4-5 MB f32/bf16 intermediates + I/O tiles  => ~8 MB, comfortably
        # under the default scoped VMEM on v5e/v6e/v7x (no override needed).
        return pl.BlockSpec(arr.shape, lambda i: (0, 0))

    grid = (b_pad // bt,)
    out = pl.pallas_call(
        regression_mlp_kernel,
        out_shape=jax.ShapeDtypeStruct((b_pad, out_pad), jnp.float32),
        grid_spec=pltpu.PrefetchScalarGridSpec(
            num_scalar_prefetch=0,
            grid=grid,
            in_specs=[
                pl.BlockSpec((bt, in_dim), lambda i: (i, 0)),
                resident(w1), resident(b1),
                resident(w2), resident(b2),
                resident(w3), resident(b3),
                resident(w4), resident(b4),
            ],
            out_specs=pl.BlockSpec((bt, out_pad), lambda i: (i, 0)),
        ),
        compiler_params=pltpu.CompilerParams(
            dimension_semantics=("parallel",),
        ),
    )(x, w1, b1, w2, b2, w3, b3, w4, b4)

    return out[:B, :out_dim]


def init_params(key, input_size, output_size):
    """Deterministic synthetic parameters (PyTorch-style fan_in uniform)."""
    dims = [(input_size, 1024), (1024, 512), (512, 256), (256, output_size)]
    params = {}
    for idx, (fan_in, fan_out) in enumerate(dims, start=1):
        key, kw, kb = jax.random.split(key, 3)
        bound = 1.0 / jnp.sqrt(float(fan_in))
        # stored as (in, out) == transpose of PyTorch's (out, in)
        params[f"w{idx}"] = jax.random.uniform(
            kw, (fan_in, fan_out), jnp.float32, -bound, bound)
        params[f"b{idx}"] = jax.random.uniform(
            kb, (1, fan_out), jnp.float32, -bound, bound)
    return params


def reference_forward(x, params):
    h = x @ params["w1"] + params["b1"]
    h = jax.nn.softmax(h, axis=1)
    h = h @ params["w2"] + params["b2"]
    h = jax.nn.softmax(h, axis=1)
    h = h @ params["w3"] + params["b3"]
    h = jax.nn.softmax(h, axis=1)
    h = h @ params["w4"] + params["b4"]
    return h


if __name__ == "__main__":
    input_size = 32
    output_size = 16
    batch = 8

    key = jax.random.PRNGKey(0)
    kx, kp = jax.random.split(key)
    x = jax.random.normal(kx, (batch, input_size), jnp.float32)
    params = init_params(kp, input_size, output_size)

    out = jax.block_until_ready(regression_network(x, params))
    ref = reference_forward(x, params)

    assert out.shape == (batch, output_size)
    # bf16 MXU operands, bf16 exp and approx-reciprocal (deferred) softmax
    # normalization => loose tolerance vs the f32 reference.
    assert jnp.allclose(out, ref, atol=2e-2, rtol=2e-2), "mismatch vs reference"

    print("KERNEL_OK")
</pallas_src>

<mosaic_0001>
module attributes {stable_mosaic.version = 11 : i64} {
  func.func @regression_mlp_kernel(%arg0: i32, %arg1: memref<16x32xbf16, #tpu.memory_space<vmem>>, %arg2: memref<32x1024xbf16, #tpu.memory_space<vmem>>, %arg3: memref<1x1024xf32, #tpu.memory_space<vmem>>, %arg4: memref<1024x512xbf16, #tpu.memory_space<vmem>>, %arg5: memref<1x512xf32, #tpu.memory_space<vmem>>, %arg6: memref<512x256xbf16, #tpu.memory_space<vmem>>, %arg7: memref<1x256xf32, #tpu.memory_space<vmem>>, %arg8: memref<256x128xbf16, #tpu.memory_space<vmem>>, %arg9: memref<1x128xf32, #tpu.memory_space<vmem>>, %arg10: memref<16x128xf32, #tpu.memory_space<vmem>>) attributes {dimension_semantics = [#tpu.dimension_semantics<parallel>], iteration_bounds = array<i64: 1>, scalar_prefetch = 0 : i64, scratch_operands = 0 : i64, tpu.core_type = #tpu.core_type<tc>, window_params = [{transform_indices = @transform_0, window_bounds = array<i64: 16, 32>}, {pipeline_mode = #tpu.pipeline_mode<synchronous>, transform_indices = @transform_1, window_bounds = array<i64: 32, 1024>}, {pipeline_mode = #tpu.pipeline_mode<synchronous>, transform_indices = @transform_2, window_bounds = array<i64: 1, 1024>}, {pipeline_mode = #tpu.pipeline_mode<synchronous>, transform_indices = @transform_3, window_bounds = array<i64: 1024, 512>}, {pipeline_mode = #tpu.pipeline_mode<synchronous>, transform_indices = @transform_4, window_bounds = array<i64: 1, 512>}, {pipeline_mode = #tpu.pipeline_mode<synchronous>, transform_indices = @transform_5, window_bounds = array<i64: 512, 256>}, {pipeline_mode = #tpu.pipeline_mode<synchronous>, transform_indices = @transform_6, window_bounds = array<i64: 1, 256>}, {pipeline_mode = #tpu.pipeline_mode<synchronous>, transform_indices = @transform_7, window_bounds = array<i64: 256, 128>}, {pipeline_mode = #tpu.pipeline_mode<synchronous>, transform_indices = @transform_8, window_bounds = array<i64: 1, 128>}, {transform_indices = @transform_9, window_bounds = array<i64: 16, 128>}]} {
    %c0 = arith.constant 0 : index
    %c0_0 = arith.constant 0 : index
    %0 = vector.load %arg1[%c0, %c0_0] : memref<16x32xbf16, #tpu.memory_space<vmem>>, vector<16x32xbf16>
    %c0_1 = arith.constant 0 : index
    %c0_2 = arith.constant 0 : index
    %1 = vector.load %arg2[%c0_1, %c0_2] : memref<32x1024xbf16, #tpu.memory_space<vmem>>, vector<32x1024xbf16>
    %cst = arith.constant dense<0.000000e+00> : vector<16x1024xf32>
    %2 = tpu.matmul %0, %1, %cst {dimension_numbers = #tpu.dot_dimension_numbers<[1], [0], [0], [1], [0, 0, 1, 1], [], []>} : vector<16x32xbf16>, vector<32x1024xbf16>, vector<16x1024xf32> -> vector<16x1024xf32>
    %c0_3 = arith.constant 0 : index
    %c0_4 = arith.constant 0 : index
    %3 = vector.load %arg3[%c0_3, %c0_4] : memref<1x1024xf32, #tpu.memory_space<vmem>>, vector<1x1024xf32>
    %4 = vector.broadcast %3 : vector<1x1024xf32> to vector<16x1024xf32>
    %5 = arith.addf %2, %4 : vector<16x1024xf32>
    %cst_5 = arith.constant dense<0xFF800000> : vector<16xf32>
    %6 = vector.multi_reduction <maximumf>, %5, %cst_5 [1] : vector<16x1024xf32> to vector<16xf32>
    %7 = vector.shape_cast %6 : vector<16xf32> to vector<16x1xf32>
    %8 = vector.broadcast %7 : vector<16x1xf32> to vector<16x1024xf32>
    %9 = arith.subf %5, %8 : vector<16x1024xf32>
    %10 = arith.truncf %9 : vector<16x1024xf32> to vector<16x1024xbf16>
    %11 = math.exp %10 : vector<16x1024xbf16>
    %12 = arith.extf %11 : vector<16x1024xbf16> to vector<16x1024xf32>
    %cst_6 = arith.constant dense<0.000000e+00> : vector<16xf32>
    %13 = vector.multi_reduction <add>, %12, %cst_6 [1] : vector<16x1024xf32> to vector<16xf32>
    %14 = vector.shape_cast %13 : vector<16xf32> to vector<16x1xf32>
    %c0_7 = arith.constant 0 : index
    %c0_8 = arith.constant 0 : index
    %15 = vector.load %arg4[%c0_7, %c0_8] : memref<1024x512xbf16, #tpu.memory_space<vmem>>, vector<1024x512xbf16>
    %cst_9 = arith.constant dense<0.000000e+00> : vector<16x512xf32>
    %16 = tpu.matmul %11, %15, %cst_9 {dimension_numbers = #tpu.dot_dimension_numbers<[1], [0], [0], [1], [0, 0, 1, 1], [], []>} : vector<16x1024xbf16>, vector<1024x512xbf16>, vector<16x512xf32> -> vector<16x512xf32>
    %17 = tpu.reciprocal %14 {approx = true} : vector<16x1xf32> -> vector<16x1xf32>
    %18 = vector.broadcast %17 : vector<16x1xf32> to vector<16x512xf32>
    %19 = arith.mulf %16, %18 : vector<16x512xf32>
    %c0_10 = arith.constant 0 : index
    %c0_11 = arith.constant 0 : index
    %20 = vector.load %arg5[%c0_10, %c0_11] : memref<1x512xf32, #tpu.memory_space<vmem>>, vector<1x512xf32>
    %21 = vector.broadcast %20 : vector<1x512xf32> to vector<16x512xf32>
    %22 = arith.addf %19, %21 : vector<16x512xf32>
    %cst_12 = arith.constant dense<0xFF800000> : vector<16xf32>
    %23 = vector.multi_reduction <maximumf>, %22, %cst_12 [1] : vector<16x512xf32> to vector<16xf32>
    %24 = vector.shape_cast %23 : vector<16xf32> to vector<16x1xf32>
    %25 = vector.broadcast %24 : vector<16x1xf32> to vector<16x512xf32>
    %26 = arith.subf %22, %25 : vector<16x512xf32>
    %27 = arith.truncf %26 : vector<16x512xf32> to vector<16x512xbf16>
    %28 = math.exp %27 : vector<16x512xbf16>
    %29 = arith.extf %28 : vector<16x512xbf16> to vector<16x512xf32>
    %cst_13 = arith.constant dense<0.000000e+00> : vector<16xf32>
    %30 = vector.multi_reduction <add>, %29, %cst_13 [1] : vector<16x512xf32> to vector<16xf32>
    %31 = vector.shape_cast %30 : vector<16xf32> to vector<16x1xf32>
    %c0_14 = arith.constant 0 : index
    %c0_15 = arith.constant 0 : index
    %32 = vector.load %arg6[%c0_14, %c0_15] : memref<512x256xbf16, #tpu.memory_space<vmem>>, vector<512x256xbf16>
    %cst_16 = arith.constant dense<0.000000e+00> : vector<16x256xf32>
    %33 = tpu.matmul %28, %32, %cst_16 {dimension_numbers = #tpu.dot_dimension_numbers<[1], [0], [0], [1], [0, 0, 1, 1], [], []>} : vector<16x512xbf16>, vector<512x256xbf16>, vector<16x256xf32> -> vector<16x256xf32>
    %34 = tpu.reciprocal %31 {approx = true} : vector<16x1xf32> -> vector<16x1xf32>
    %35 = vector.broadcast %34 : vector<16x1xf32> to vector<16x256xf32>
    %36 = arith.mulf %33, %35 : vector<16x256xf32>
    %c0_17 = arith.constant 0 : index
    %c0_18 = arith.constant 0 : index
    %37 = vector.load %arg7[%c0_17, %c0_18] : memref<1x256xf32, #tpu.memory_space<vmem>>, vector<1x256xf32>
    %38 = vector.broadcast %37 : vector<1x256xf32> to vector<16x256xf32>
    %39 = arith.addf %36, %38 : vector<16x256xf32>
    %cst_19 = arith.constant dense<0xFF800000> : vector<16xf32>
    %40 = vector.multi_reduction <maximumf>, %39, %cst_19 [1] : vector<16x256xf32> to vector<16xf32>
    %41 = vector.shape_cast %40 : vector<16xf32> to vector<16x1xf32>
    %42 = vector.broadcast %41 : vector<16x1xf32> to vector<16x256xf32>
    %43 = arith.subf %39, %42 : vector<16x256xf32>
    %44 = arith.truncf %43 : vector<16x256xf32> to vector<16x256xbf16>
    %45 = math.exp %44 : vector<16x256xbf16>
    %46 = arith.extf %45 : vector<16x256xbf16> to vector<16x256xf32>
    %cst_20 = arith.constant dense<0.000000e+00> : vector<16xf32>
    %47 = vector.multi_reduction <add>, %46, %cst_20 [1] : vector<16x256xf32> to vector<16xf32>
    %48 = vector.shape_cast %47 : vector<16xf32> to vector<16x1xf32>
    %c0_21 = arith.constant 0 : index
    %c0_22 = arith.constant 0 : index
    %49 = vector.load %arg8[%c0_21, %c0_22] : memref<256x128xbf16, #tpu.memory_space<vmem>>, vector<256x128xbf16>
    %cst_23 = arith.constant dense<0.000000e+00> : vector<16x128xf32>
    %50 = tpu.matmul %45, %49, %cst_23 {dimension_numbers = #tpu.dot_dimension_numbers<[1], [0], [0], [1], [0, 0, 1, 1], [], []>} : vector<16x256xbf16>, vector<256x128xbf16>, vector<16x128xf32> -> vector<16x128xf32>
    %51 = tpu.reciprocal %48 {approx = true} : vector<16x1xf32> -> vector<16x1xf32>
    %52 = vector.broadcast %51 : vector<16x1xf32> to vector<16x128xf32>
    %53 = arith.mulf %50, %52 : vector<16x128xf32>
    %c0_24 = arith.constant 0 : index
    %c0_25 = arith.constant 0 : index
    %54 = vector.load %arg9[%c0_24, %c0_25] : memref<1x128xf32, #tpu.memory_space<vmem>>, vector<1x128xf32>
    %55 = vector.broadcast %54 : vector<1x128xf32> to vector<16x128xf32>
    %56 = arith.addf %53, %55 : vector<16x128xf32>
    %c0_26 = arith.constant 0 : index
    %c0_27 = arith.constant 0 : index
    %57 = vector.load %arg10[%c0_26, %c0_27] : memref<16x128xf32, #tpu.memory_space<vmem>>, vector<16x128xf32>
    tpu.vector_store %arg10[%c0_26, %c0_27], %56 {strides = array<i32>} : memref<16x128xf32, #tpu.memory_space<vmem>>, vector<16x128xf32>,
    return
  }
  func.func @transform_0(%arg0: i32) -> (i32, i32) {
    %c0_i32 = arith.constant 0 : i32
    %c0_i32_0 = arith.constant 0 : i32
    return %arg0, %c0_i32 : i32, i32
  }
  func.func @transform_1(%arg0: i32) -> (i32, i32) {
    %c0_i32 = arith.constant 0 : i32
    %c0_i32_0 = arith.constant 0 : i32
    %c0_i32_1 = arith.constant 0 : i32
    return %c0_i32, %c0_i32_0 : i32, i32
  }
  func.func @transform_2(%arg0: i32) -> (i32, i32) {
    %c0_i32 = arith.constant 0 : i32
    %c0_i32_0 = arith.constant 0 : i32
    %c0_i32_1 = arith.constant 0 : i32
    return %c0_i32, %c0_i32_0 : i32, i32
  }
  func.func @transform_3(%arg0: i32) -> (i32, i32) {
    %c0_i32 = arith.constant 0 : i32
    %c0_i32_0 = arith.constant 0 : i32
    %c0_i32_1 = arith.constant 0 : i32
    return %c0_i32, %c0_i32_0 : i32, i32
  }
  func.func @transform_4(%arg0: i32) -> (i32, i32) {
    %c0_i32 = arith.constant 0 : i32
    %c0_i32_0 = arith.constant 0 : i32
    %c0_i32_1 = arith.constant 0 : i32
    return %c0_i32, %c0_i32_0 : i32, i32
  }
  func.func @transform_5(%arg0: i32) -> (i32, i32) {
    %c0_i32 = arith.constant 0 : i32
    %c0_i32_0 = arith.constant 0 : i32
    %c0_i32_1 = arith.constant 0 : i32
    return %c0_i32, %c0_i32_0 : i32, i32
  }
  func.func @transform_6(%arg0: i32) -> (i32, i32) {
    %c0_i32 = arith.constant 0 : i32
    %c0_i32_0 = arith.constant 0 : i32
    %c0_i32_1 = arith.constant 0 : i32
    return %c0_i32, %c0_i32_0 : i32, i32
  }
  func.func @transform_7(%arg0: i32) -> (i32, i32) {
    %c0_i32 = arith.constant 0 : i32
    %c0_i32_0 = arith.constant 0 : i32
    %c0_i32_1 = arith.constant 0 : i32
    return %c0_i32, %c0_i32_0 : i32, i32
  }
  func.func @transform_8(%arg0: i32) -> (i32, i32) {
    %c0_i32 = arith.constant 0 : i32
    %c0_i32_0 = arith.constant 0 : i32
    %c0_i32_1 = arith.constant 0 : i32
    return %c0_i32, %c0_i32_0 : i32, i32
  }
  func.func @transform_9(%arg0: i32) -> (i32, i32) {
    %c0_i32 = arith.constant 0 : i32
    %c0_i32_0 = arith.constant 0 : i32
    return %arg0, %c0_i32 : i32, i32
  }
}

</mosaic_0001>

<llo_original>
// kernel: tpu_custom_call.1
$region0: #{tpu_custom_call.1}
  #allocation0 [shape = 'u32[]', space=smem, size = 0x4, offset = 0x4, fixed_abs, tag = 'smem constant byte address 0x4 - core index']
  #allocation1 [shape = 'u32[144,128]{1,0:T(1,128)}', space=vmem, size = 0x12000, scoped, tag = 'internal scratch']
  %s0 = inlined_call_operand.hbm [shape: bf16[16,32], index: 0, kind: input, shape index: {}]
  %s1 = inlined_call_operand.hbm [shape: bf16[32,1024], index: 1, kind: input, shape index: {}]
  %s2 = inlined_call_operand.hbm [shape: f32[1,1024], index: 2, kind: input, shape index: {}]
  %s3 = inlined_call_operand.hbm [shape: bf16[1024,512], index: 3, kind: input, shape index: {}]
  %s4 = inlined_call_operand.vmem [shape: f32[1,512], index: 4, kind: input, shape index: {}]
  %s5 = inlined_call_operand.hbm [shape: bf16[512,256], index: 5, kind: input, shape index: {}]
  %s6 = inlined_call_operand.vmem [shape: f32[1,256], index: 6, kind: input, shape index: {}]
  %s7 = inlined_call_operand.hbm [shape: bf16[256,128], index: 7, kind: input, shape index: {}]
  %s8 = inlined_call_operand.vmem [shape: f32[1,128], index: 8, kind: input, shape index: {}]
  %s9 = inlined_call_operand.hbm [shape: f32[16,128], index: 9, kind: output, shape index: {}]
  %s10 = sld [smem:[#allocation0]]
  $region70: #{tpu_custom_call.1} parent=0
    _
  %s12 = ssub.s32 1, %s10
  %s13 = scalar_select 0, %s12, %s10
  $region1: #{tpu_custom_call.1} parent=0
    #allocation2 [shape = 'u8[4096]{0}', space=vmem, size = 0x1000, scoped, tag = 'input window, operand 0, single buffered']
    #allocation3 [shape = 's32[1]{0}', space=sflag, size = 0x4, scoped, tag = 'scoped memory for tpu_custom_call.1']
    #allocation4 [shape = 's32[1]{0}', space=sflag, size = 0x4, scoped, tag = 'scoped memory for tpu_custom_call.1']
    #allocation5 [shape = 'u8[65536]{0}', space=vmem, size = 0x10000, scoped, tag = 'input window, operand 1, single buffered']
    #allocation6 [shape = 's32[1]{0}', space=sflag, size = 0x4, scoped, tag = 'scoped memory for tpu_custom_call.1']
    #allocation7 [shape = 'u8[4096]{0}', space=vmem, size = 0x1000, scoped, tag = 'input window, operand 2, single buffered']
    #allocation8 [shape = 'u8[1048576]{0}', space=vmem, size = 0x100000, scoped, tag = 'input window, operand 3, single buffered']
    #allocation9 [shape = 's32[1]{0}', space=sflag, size = 0x4, scoped, tag = 'scoped memory for tpu_custom_call.1']
    #allocation10 [shape = 'u8[262144]{0}', space=vmem, size = 0x40000, scoped, tag = 'input window, operand 5, single buffered']
    #allocation11 [shape = 'u8[65536]{0}', space=vmem, size = 0x10000, scoped, tag = 'input window, operand 7, single buffered']
    #allocation12 [shape = 's32[1]{0}', space=sflag, size = 0x4, scoped, tag = 'scoped memory for tpu_custom_call.1']
    #allocation13 [shape = 'u8[8192]{0}', space=vmem, size = 0x2000, scoped, tag = 'output window, operand 0, single buffered']
    %14 = vsyncpa [#allocation3], 0
    %15 = vsyncpa [#allocation6], 0
    %16 = vsyncpa [#allocation9], 0
    %17 = vsyncpa [#allocation12], 0
    %18 = vsyncpa [#allocation4], 0
    // Predicated region
    $region2: #{tpu_custom_call.1} parent=1 // pred_check
      _
    $region3: #{tpu_custom_call.1} parent=1 // pred_check_branch
      %20 = sbr.rel (0) target = $region5
    $region4: #{tpu_custom_call.1} parent=1 // pred_region
      %s22 = ssub.s32 128, 128
      %23 = vsyncadd [#allocation3], %s22
      %s24 = sshll.u32 [#allocation2], 4
      %s25 = int_to_ptr.vmem [resolvable:$true] %s24
      %30 = dma.hbm_to_vmem [thread:$0]  %s0, 128, %s25, [#allocation3], 64, 64, 4
    $region5: #{tpu_custom_call.1} parent=1 // pred_fallthru
      _
    // Predicated region
    $region6: #{tpu_custom_call.1} parent=1 // pred_check
      _
    $region7: #{tpu_custom_call.1} parent=1 // pred_check_branch
      %32 = sbr.rel (0) target = $region9
    $region8: #{tpu_custom_call.1} parent=1 // pred_region
      %s34 = ssub.s32 2048, 2048
      %35 = vsyncadd [#allocation6], %s34
      %s36 = sshll.u32 [#allocation5], 4
      %s37 = int_to_ptr.vmem [resolvable:$true] %s36
      %42 = dma.hbm_to_vmem [thread:$0]  %s1, 2048, %s37, [#allocation6], 512, 512, 32
    $region9: #{tpu_custom_call.1} parent=1 // pred_fallthru
      _
    // Predicated region
    $region10: #{tpu_custom_call.1} parent=1 // pred_check
      _
    $region11: #{tpu_custom_call.1} parent=1 // pred_check_branch
      %44 = sbr.rel (0) target = $region13
    $region12: #{tpu_custom_call.1} parent=1 // pred_region
      %s46 = ssub.s32 128, 128
      %47 = vsyncadd [#allocation6], %s46
      %s49 = sshll.u32 [#allocation7], 4
      %s50 = int_to_ptr.vmem [resolvable:$true] %s49
      %52 = dma.hbm_to_vmem [thread:$0]  %s2, 128, %s50, [#allocation6]
    $region13: #{tpu_custom_call.1} parent=1 // pred_fallthru
      _
    // Predicated region
    $region14: #{tpu_custom_call.1} parent=1 // pred_check
      _
    $region15: #{tpu_custom_call.1} parent=1 // pred_check_branch
      %54 = sbr.rel (0) target = $region17
    $region16: #{tpu_custom_call.1} parent=1 // pred_region
      %s56 = ssub.s32 32768, 32768
      %57 = vsyncadd [#allocation9], %s56
      %s58 = sshll.u32 [#allocation8], 4
      %s59 = int_to_ptr.vmem [resolvable:$true] %s58
      %64 = dma.hbm_to_vmem [thread:$0]  %s3, 32768, %s59, [#allocation9], 256, 256, 16
    $region17: #{tpu_custom_call.1} parent=1 // pred_fallthru
      _
    // Predicated region
    $region18: #{tpu_custom_call.1} parent=1 // pred_check
      _
    $region19: #{tpu_custom_call.1} parent=1 // pred_check_branch
      %66 = sbr.rel (0) target = $region21
    $region20: #{tpu_custom_call.1} parent=1 // pred_region
      _
    $region21: #{tpu_custom_call.1} parent=1 // pred_fallthru
      _
    // Predicated region
    $region22: #{tpu_custom_call.1} parent=1 // pred_check
      _
    $region23: #{tpu_custom_call.1} parent=1 // pred_check_branch
      %68 = sbr.rel (0) target = $region25
    $region24: #{tpu_custom_call.1} parent=1 // pred_region
      %s70 = ssub.s32 8192, 8192
      %71 = vsyncadd [#allocation9], %s70
      %s72 = sshll.u32 [#allocation10], 4
      %s73 = int_to_ptr.vmem [resolvable:$true] %s72
      %78 = dma.hbm_to_vmem [thread:$0]  %s5, 8192, %s73, [#allocation9], 128, 128, 8
    $region25: #{tpu_custom_call.1} parent=1 // pred_fallthru
      _
    // Predicated region
    $region26: #{tpu_custom_call.1} parent=1 // pred_check
      _
    $region27: #{tpu_custom_call.1} parent=1 // pred_check_branch
      %80 = sbr.rel (0) target = $region29
    $region28: #{tpu_custom_call.1} parent=1 // pred_region
      _
    $region29: #{tpu_custom_call.1} parent=1 // pred_fallthru
      _
    // Predicated region
    $region30: #{tpu_custom_call.1} parent=1 // pred_check
      _
    $region31: #{tpu_custom_call.1} parent=1 // pred_check_branch
      %82 = sbr.rel (0) target = $region33
    $region32: #{tpu_custom_call.1} parent=1 // pred_region
      %s84 = ssub.s32 2048, 2048
      %85 = vsyncadd [#allocation12], %s84
      %s86 = sshll.u32 [#allocation11], 4
      %s87 = int_to_ptr.vmem [resolvable:$true] %s86
      %92 = dma.hbm_to_vmem [thread:$0]  %s7, 2048, %s87, [#allocation12], 64, 64, 4
    $region33: #{tpu_custom_call.1} parent=1 // pred_fallthru
      _
    // Predicated region
    $region34: #{tpu_custom_call.1} parent=1 // pred_check
      _
    $region35: #{tpu_custom_call.1} parent=1 // pred_check_branch
      %94 = sbr.rel (0) target = $region37
    $region36: #{tpu_custom_call.1} parent=1 // pred_region
      _
    $region37: #{tpu_custom_call.1} parent=1 // pred_fallthru
      _
    // Predicated region
    $region38: #{tpu_custom_call.1} parent=1 // pred_check
      _
    $region39: #{tpu_custom_call.1} parent=1 // pred_check_branch
      %96 = sbr.rel (0) target = $region41
    $region40: #{tpu_custom_call.1} parent=1 // pred_region
      %97 = dma.done [#allocation3], 128
    $region41: #{tpu_custom_call.1} parent=1 // pred_fallthru
      _
    // Predicated region
    $region42: #{tpu_custom_call.1} parent=1 // pred_check
      _
    $region43: #{tpu_custom_call.1} parent=1 // pred_check_branch
      %99 = sbr.rel (0) target = $region45
    $region44: #{tpu_custom_call.1} parent=1 // pred_region
      %100 = dma.done [#allocation6], 2048
    $region45: #{tpu_custom_call.1} parent=1 // pred_fallthru
      _
    // Predicated region
    $region46: #{tpu_custom_call.1} parent=1 // pred_check
      _
    $region47: #{tpu_custom_call.1} parent=1 // pred_check_branch
      %102 = sbr.rel (0) target = $region49
    $region48: #{tpu_custom_call.1} parent=1 // pred_region
      %103 = dma.done [#allocation6], 128
    $region49: #{tpu_custom_call.1} parent=1 // pred_fallthru
      _
    // Predicated region
    $region50: #{tpu_custom_call.1} parent=1 // pred_check
      _
    $region51: #{tpu_custom_call.1} parent=1 // pred_check_branch
      %105 = sbr.rel (0) target = $region53
    $region52: #{tpu_custom_call.1} parent=1 // pred_region
      %106 = dma.done [#allocation9], 32768
    $region53: #{tpu_custom_call.1} parent=1 // pred_fallthru
      _
    // Predicated region
    $region54: #{tpu_custom_call.1} parent=1 // pred_check
      _
    $region55: #{tpu_custom_call.1} parent=1 // pred_check_branch
      %108 = sbr.rel (0) target = $region57
    $region56: #{tpu_custom_call.1} parent=1 // pred_region
      %109 = dma.done [#allocation9], 8192
    $region57: #{tpu_custom_call.1} parent=1 // pred_fallthru
      _
    // Predicated region
    $region58: #{tpu_custom_call.1} parent=1 // pred_check
      _
    $region59: #{tpu_custom_call.1} parent=1 // pred_check_branch
      %111 = sbr.rel (0) target = $region61
    $region60: #{tpu_custom_call.1} parent=1 // pred_region
      %112 = dma.done [#allocation12], 2048
    $region61: #{tpu_custom_call.1} parent=1 // pred_fallthru
      _
    %v114 = vld [vmem:[#allocation2] sm:$0xf]
    %v115 = vld [vmem:[#allocation2 + $0x4] sm:$0xf]
    %v116 = vld [vmem:[#allocation5] sm:$0xff]
    %v117 = vld [vmem:[#allocation5 + $0x8] sm:$0xff]
    %v118 = vld [vmem:[#allocation5 + $0x10] sm:$0xff]
    %v119 = vld [vmem:[#allocation5 + $0x18] sm:$0xff]
    %v120 = vld [vmem:[#allocation5 + $0x20] sm:$0xff]
    %v121 = vld [vmem:[#allocation5 + $0x28] sm:$0xff]
    %v122 = vld [vmem:[#allocation5 + $0x30] sm:$0xff]
    %v123 = vld [vmem:[#allocation5 + $0x38] sm:$0xff]
    %v124 = vld [vmem:[#allocation5 + $0x40] sm:$0xff]
    %v125 = vld [vmem:[#allocation5 + $0x48] sm:$0xff]
    %v126 = vld [vmem:[#allocation5 + $0x50] sm:$0xff]
    %v127 = vld [vmem:[#allocation5 + $0x58] sm:$0xff]
    %v128 = vld [vmem:[#allocation5 + $0x60] sm:$0xff]
    %v129 = vld [vmem:[#allocation5 + $0x68] sm:$0xff]
    %v130 = vld [vmem:[#allocation5 + $0x70] sm:$0xff]
    %v131 = vld [vmem:[#allocation5 + $0x78] sm:$0xff]
    %v132 = vld [vmem:[#allocation7] sm:$0xff]
    %v134 = vlaneseq
    %v135 = vshrl.u32 %v134, 7
    %v136 = vsub.s32 0, %v135
    %v137 = vrot.slane %v132, %v136
    %v138 = vlaneseq
    %v139 = vshrl.u32 %v138, 7
    %v140 = vsub.s32 1, %v139
    %v141 = vrot.slane %v132, %v140
    %v142 = vlaneseq
    %v143 = vshrl.u32 %v142, 7
    %v144 = vsub.s32 2, %v143
    %v145 = vrot.slane %v132, %v144
    %v146 = vlaneseq
    %v147 = vshrl.u32 %v146, 7
    %v148 = vsub.s32 3, %v147
    %v149 = vrot.slane %v132, %v148
    %v150 = vlaneseq
    %v151 = vshrl.u32 %v150, 7
    %v152 = vsub.s32 4, %v151
    %v153 = vrot.slane %v132, %v152
    %v154 = vlaneseq
    %v155 = vshrl.u32 %v154, 7
    %v156 = vsub.s32 5, %v155
    %v157 = vrot.slane %v132, %v156
    %v158 = vlaneseq
    %v159 = vshrl.u32 %v158, 7
    %v160 = vsub.s32 6, %v159
    %v161 = vrot.slane %v132, %v160
    %v162 = vlaneseq
    %v163 = vshrl.u32 %v162, 7
    %v164 = vsub.s32 7, %v163
    %v165 = vrot.slane %v132, %v164
    %v176 = vunpack.c.l.b16 %v114
    %v177 = vunpack.c.l.b16 %v115
    %v178 = vpack.c.b16 %v177, %v176
    %v195 = vunpack.c.l.b16 %v116
    %v196 = vunpack.c.h.b16 %v116
    %v197 = vunpack.c.l.b16 %v117
    %v198 = vunpack.c.h.b16 %v117
    %v199 = vunpack.c.l.b16 %v118
    %v200 = vunpack.c.h.b16 %v118
    %v201 = vunpack.c.l.b16 %v119
    %v202 = vunpack.c.h.b16 %v119
    %v203 = vunpack.c.l.b16 %v120
    %v204 = vunpack.c.h.b16 %v120
    %v205 = vunpack.c.l.b16 %v121
    %v206 = vunpack.c.h.b16 %v121
    %v207 = vunpack.c.l.b16 %v122
    %v208 = vunpack.c.h.b16 %v122
    %v209 = vunpack.c.l.b16 %v123
    %v210 = vunpack.c.h.b16 %v123
    %v211 = vunpack.c.l.b16 %v124
    %v212 = vunpack.c.h.b16 %v124
    %v213 = vunpack.c.l.b16 %v125
    %v214 = vunpack.c.h.b16 %v125
    %v215 = vunpack.c.l.b16 %v126
    %v216 = vunpack.c.h.b16 %v126
    %v217 = vunpack.c.l.b16 %v127
    %v218 = vunpack.c.h.b16 %v127
    %v219 = vunpack.c.l.b16 %v128
    %v220 = vunpack.c.h.b16 %v128
    %v221 = vunpack.c.l.b16 %v129
    %v222 = vunpack.c.h.b16 %v129
    %v223 = vunpack.c.l.b16 %v130
    %v224 = vunpack.c.h.b16 %v130
    %v225 = vunpack.c.l.b16 %v131
    %v226 = vunpack.c.h.b16 %v131
    %v227 = vpack.c.b16 %v203, %v195
    %v228 = vpack.c.b16 %v204, %v196
    %v229 = vpack.c.b16 %v205, %v197
    %v230 = vpack.c.b16 %v206, %v198
    %v231 = vpack.c.b16 %v207, %v199
    %v232 = vpack.c.b16 %v208, %v200
    %v233 = vpack.c.b16 %v209, %v201
    %v234 = vpack.c.b16 %v210, %v202
    %v235 = vpack.c.b16 %v219, %v211
    %v236 = vpack.c.b16 %v220, %v212
    %v237 = vpack.c.b16 %v221, %v213
    %v238 = vpack.c.b16 %v222, %v214
    %v239 = vpack.c.b16 %v223, %v215
    %v240 = vpack.c.b16 %v224, %v216
    %v241 = vpack.c.b16 %v225, %v217
    %v242 = vpack.c.b16 %v226, %v218
    %vm259 = vcmask 261120
    %v261 = vsel %vm259, %v178, 0
    %263 = vmatprep.subr.bf16.mxu0 0
    %264 = vmatpush1.bf16.msra.mxu0 0
    %265 = vmatprep.subr.bf16.mxu0 0
    %266 = vmatpush1.bf16.msra.mxu0 0
    %267 = vmatprep.subr.bf16.mxu0 0
    %268 = vmatpush1.bf16.msra.mxu0 0
    %269 = vmatprep.subr.bf16.mxu0 0
    %270 = vmatpush1.bf16.msra.mxu0 0
    %271 = vmatprep.subr.bf16.mxu0 0
    %272 = vmatpush1.bf16.msra.mxu0 0
    %273 = vmatprep.subr.bf16.mxu0 0
    %274 = vmatpush1.bf16.msra.mxu0 0
    %275 = vmatprep.subr.bf16.mxu0 %v236
    %276 = vmatpush1.bf16.msra.mxu0 %v235
    %277 = vmatprep.subr.bf16.mxu0 %v228
    %278 = vmatpush1.bf16.msra.mxu0 %v227
    %279 = vmatprep.subr.bf16.mxu0 0
    %280 = vmatpush2.bf16.msra.mxu0 0
    %281 = vmatprep.subr.bf16.mxu0 0
    %282 = vmatpush2.bf16.msra.mxu0 0
    %283 = vmatprep.subr.bf16.mxu0 0
    %284 = vmatpush2.bf16.msra.mxu0 0
    %285 = vmatprep.subr.bf16.mxu0 0
    %286 = vmatpush2.bf16.msra.mxu0 0
    %287 = vmatprep.subr.bf16.mxu0 0
    %288 = vmatpush2.bf16.msra.mxu0 0
    %289 = vmatprep.subr.bf16.mxu0 0
    %290 = vmatpush2.bf16.msra.mxu0 0
    %291 = vmatprep.subr.bf16.mxu0 0
    %292 = vmatpush2.bf16.msra.mxu0 0
    %293 = vmatprep.subr.bf16.mxu0 0
    %294 = vmatpush2.bf16.msra.mxu0 0
    %295 = vmatprep.mubr.bf16.mxu0 0
    %296 = vmatmul.mubr.bf16.gmra.mxu0 %v261
    %v297 = vpop.f32.mrf.mxu0
    %v298 = vadd.f32 %v137, %v297
    %v299 = vpop.f32.mrf.mxu0
    %v300 = vadd.f32 %v141, %v299
    %v301 = vpop.f32.mrf.mxu0
    %v302 = vadd.f32 %v137, %v301
    %v303 = vpop.f32.mrf.mxu0
    %v304 = vadd.f32 %v141, %v303
    %305 = vdwg.mxu0
    %306 = vmatprep.subr.bf16.mxu0 0
    %307 = vmatpush1.bf16.msra.mxu0 0
    %308 = vmatprep.subr.bf16.mxu0 0
    %309 = vmatpush1.bf16.msra.mxu0 0
    %310 = vmatprep.subr.bf16.mxu0 0
    %311 = vmatpush1.bf16.msra.mxu0 0
    %312 = vmatprep.subr.bf16.mxu0 0
    %313 = vmatpush1.bf16.msra.mxu0 0
    %314 = vmatprep.subr.bf16.mxu0 0
    %315 = vmatpush1.bf16.msra.mxu0 0
    %316 = vmatprep.subr.bf16.mxu0 0
    %317 = vmatpush1.bf16.msra.mxu0 0
    %318 = vmatprep.subr.bf16.mxu0 %v238
    %319 = vmatpush1.bf16.msra.mxu0 %v237
    %320 = vmatprep.subr.bf16.mxu0 %v230
    %321 = vmatpush1.bf16.msra.mxu0 %v229
    %322 = vmatprep.subr.bf16.mxu0 0
    %323 = vmatpush2.bf16.msra.mxu0 0
    %324 = vmatprep.subr.bf16.mxu0 0
    %325 = vmatpush2.bf16.msra.mxu0 0
    %326 = vmatprep.subr.bf16.mxu0 0
    %327 = vmatpush2.bf16.msra.mxu0 0
    %328 = vmatprep.subr.bf16.mxu0 0
    %329 = vmatpush2.bf16.msra.mxu0 0
    %330 = vmatprep.subr.bf16.mxu0 0
    %331 = vmatpush2.bf16.msra.mxu0 0
    %332 = vmatprep.subr.bf16.mxu0 0
    %333 = vmatpush2.bf16.msra.mxu0 0
    %334 = vmatprep.subr.bf16.mxu0 0
    %335 = vmatpush2.bf16.msra.mxu0 0
    %336 = vmatprep.subr.bf16.mxu0 0
    %337 = vmatpush2.bf16.msra.mxu0 0
    %338 = vmatprep.mubr.bf16.mxu0 0
    %339 = vmatmul.mubr.bf16.gmra.mxu0 %v261
    %v340 = vpop.f32.mrf.mxu0
    %v341 = vadd.f32 %v145, %v340
    %v342 = vpop.f32.mrf.mxu0
    %v343 = vadd.f32 %v149, %v342
    %v344 = vpop.f32.mrf.mxu0
    %v345 = vadd.f32 %v145, %v344
    %v346 = vpop.f32.mrf.mxu0
    %v347 = vadd.f32 %v149, %v346
    %348 = vdwg.mxu0
    %349 = vmatprep.subr.bf16.mxu0 0
    %350 = vmatpush1.bf16.msra.mxu0 0
    %351 = vmatprep.subr.bf16.mxu0 0
    %352 = vmatpush1.bf16.msra.mxu0 0
    %353 = vmatprep.subr.bf16.mxu0 0
    %354 = vmatpush1.bf16.msra.mxu0 0
    %355 = vmatprep.subr.bf16.mxu0 0
    %356 = vmatpush1.bf16.msra.mxu0 0
    %357 = vmatprep.subr.bf16.mxu0 0
    %358 = vmatpush1.bf16.msra.mxu0 0
    %359 = vmatprep.subr.bf16.mxu0 0
    %360 = vmatpush1.bf16.msra.mxu0 0
    %361 = vmatprep.subr.bf16.mxu0 %v240
    %362 = vmatpush1.bf16.msra.mxu0 %v239
    %363 = vmatprep.subr.bf16.mxu0 %v232
    %364 = vmatpush1.bf16.msra.mxu0 %v231
    %365 = vmatprep.subr.bf16.mxu0 0
    %366 = vmatpush2.bf16.msra.mxu0 0
    %367 = vmatprep.subr.bf16.mxu0 0
    %368 = vmatpush2.bf16.msra.mxu0 0
    %369 = vmatprep.subr.bf16.mxu0 0
    %370 = vmatpush2.bf16.msra.mxu0 0
    %371 = vmatprep.subr.bf16.mxu0 0
    %372 = vmatpush2.bf16.msra.mxu0 0
    %373 = vmatprep.subr.bf16.mxu0 0
    %374 = vmatpush2.bf16.msra.mxu0 0
    %375 = vmatprep.subr.bf16.mxu0 0
    %376 = vmatpush2.bf16.msra.mxu0 0
    %377 = vmatprep.subr.bf16.mxu0 0
    %378 = vmatpush2.bf16.msra.mxu0 0
    %379 = vmatprep.subr.bf16.mxu0 0
    %380 = vmatpush2.bf16.msra.mxu0 0
    %381 = vmatprep.mubr.bf16.mxu0 0
    %382 = vmatmul.mubr.bf16.gmra.mxu0 %v261
    %v383 = vpop.f32.mrf.mxu0
    %v384 = vadd.f32 %v153, %v383
    %v385 = vpop.f32.mrf.mxu0
    %v386 = vadd.f32 %v157, %v385
    %v387 = vpop.f32.mrf.mxu0
    %v388 = vadd.f32 %v153, %v387
    %v389 = vpop.f32.mrf.mxu0
    %v390 = vadd.f32 %v157, %v389
    %391 = vdwg.mxu0
    %392 = vmatprep.subr.bf16.mxu0 0
    %393 = vmatpush1.bf16.msra.mxu0 0
    %394 = vmatprep.subr.bf16.mxu0 0
    %395 = vmatpush1.bf16.msra.mxu0 0
    %396 = vmatprep.subr.bf16.mxu0 0
    %397 = vmatpush1.bf16.msra.mxu0 0
    %398 = vmatprep.subr.bf16.mxu0 0
    %399 = vmatpush1.bf16.msra.mxu0 0
    %400 = vmatprep.subr.bf16.mxu0 0
    %401 = vmatpush1.bf16.msra.mxu0 0
    %402 = vmatprep.subr.bf16.mxu0 0
    %403 = vmatpush1.bf16.msra.mxu0 0
    %404 = vmatprep.subr.bf16.mxu0 %v242
    %405 = vmatpush1.bf16.msra.mxu0 %v241
    %406 = vmatprep.subr.bf16.mxu0 %v234
    %407 = vmatpush1.bf16.msra.mxu0 %v233
    %408 = vmatprep.subr.bf16.mxu0 0
    %409 = vmatpush2.bf16.msra.mxu0 0
    %410 = vmatprep.subr.bf16.mxu0 0
    %411 = vmatpush2.bf16.msra.mxu0 0
    %412 = vmatprep.subr.bf16.mxu0 0
    %413 = vmatpush2.bf16.msra.mxu0 0
    %414 = vmatprep.subr.bf16.mxu0 0
    %415 = vmatpush2.bf16.msra.mxu0 0
    %416 = vmatprep.subr.bf16.mxu0 0
    %417 = vmatpush2.bf16.msra.mxu0 0
    %418 = vmatprep.subr.bf16.mxu0 0
    %419 = vmatpush2.bf16.msra.mxu0 0
    %420 = vmatprep.subr.bf16.mxu0 0
    %421 = vmatpush2.bf16.msra.mxu0 0
    %422 = vmatprep.subr.bf16.mxu0 0
    %423 = vmatpush2.bf16.msra.mxu0 0
    %424 = vmatprep.mubr.bf16.mxu0 0
    %425 = vmatmul.mubr.bf16.gmra.mxu0 %v261
    %v426 = vpop.f32.mrf.mxu0
    %v427 = vadd.f32 %v161, %v426
    %v428 = vpop.f32.mrf.mxu0
    %v429 = vadd.f32 %v165, %v428
    %v430 = vpop.f32.mrf.mxu0
    %v431 = vadd.f32 %v161, %v430
    %v432 = vpop.f32.mrf.mxu0
    %v433 = vadd.f32 %v165, %v432
    %434 = vdwg.mxu0
    %v435 = vmax.f32 %v298, %v341
    %v436 = vmax.f32 %v300, %v343
    %v437 = vmax.f32 %v435, %v384
    %v438 = vmax.f32 %v436, %v386
    %v439 = vmax.f32 %v437, %v427
    %v440 = vmax.f32 %v438, %v429
    %v441 = vmax.f32 %v439, %v440
    %442 = vmax.xlane.f32.xlu0 %v441
    %v443 = vpop.xlane.xlu0 %442
    %v444 = vmax.f32 %v302, %v345
    %v445 = vmax.f32 %v304, %v347
    %v446 = vmax.f32 %v444, %v388
    %v447 = vmax.f32 %v445, %v390
    %v448 = vmax.f32 %v446, %v431
    %v449 = vmax.f32 %v447, %v433
    %v450 = vmax.f32 %v448, %v449
    %451 = vmax.xlane.f32.xlu0 %v450
    %v452 = vpop.xlane.xlu0 %451
    %v453 = vsub.f32 %v298, %v443
    %v454 = vsub.f32 %v300, %v443
    %v455 = vsub.f32 %v341, %v443
    %v456 = vsub.f32 %v343, %v443
    %v457 = vsub.f32 %v384, %v443
    %v458 = vsub.f32 %v386, %v443
    %v459 = vsub.f32 %v427, %v443
    %v460 = vsub.f32 %v429, %v443
    %v461 = vsub.f32 %v302, %v452
    %v462 = vsub.f32 %v304, %v452
    %v463 = vsub.f32 %v345, %v452
    %v464 = vsub.f32 %v347, %v452
    %v465 = vsub.f32 %v388, %v452
    %v466 = vsub.f32 %v390, %v452
    %v467 = vsub.f32 %v431, %v452
    %v468 = vsub.f32 %v433, %v452
    %v469 = vpack.c.bf16 %v461, %v453
    %v470 = vpack.c.bf16 %v462, %v454
    %v471 = vpack.c.bf16 %v463, %v455
    %v472 = vpack.c.bf16 %v464, %v456
    %v473 = vpack.c.bf16 %v465, %v457
    %v474 = vpack.c.bf16 %v466, %v458
    %v475 = vpack.c.bf16 %v467, %v459
    %v476 = vpack.c.bf16 %v468, %v460
    %v478 = vmul.bf16 %v469, 1069105081
    %v479 = vpow.bf16.pop %v478
    %v481 = vmul.bf16 %v470, 1069105081
    %v482 = vpow.bf16.pop %v481
    %v484 = vmul.bf16 %v471, 1069105081
    %v485 = vpow.bf16.pop %v484
    %v487 = vmul.bf16 %v472, 1069105081
    %v488 = vpow.bf16.pop %v487
    %v490 = vmul.bf16 %v473, 1069105081
    %v491 = vpow.bf16.pop %v490
    %v493 = vmul.bf16 %v474, 1069105081
    %v494 = vpow.bf16.pop %v493
    %v496 = vmul.bf16 %v475, 1069105081
    %v497 = vpow.bf16.pop %v496
    %v499 = vmul.bf16 %v476, 1069105081
    %v500 = vpow.bf16.pop %v499
    %v501 = vunpack.c.l.bf16 %v479
    %v502 = vunpack.c.l.bf16 %v482
    %v503 = vunpack.c.l.bf16 %v485
    %v504 = vunpack.c.l.bf16 %v488
    %v505 = vunpack.c.l.bf16 %v491
    %v506 = vunpack.c.l.bf16 %v494
    %v507 = vunpack.c.l.bf16 %v497
    %v508 = vunpack.c.l.bf16 %v500
    %v509 = vunpack.c.h.bf16 %v479
    %v510 = vunpack.c.h.bf16 %v482
    %v511 = vunpack.c.h.bf16 %v485
    %v512 = vunpack.c.h.bf16 %v488
    %v513 = vunpack.c.h.bf16 %v491
    %v514 = vunpack.c.h.bf16 %v494
    %v515 = vunpack.c.h.bf16 %v497
    %v516 = vunpack.c.h.bf16 %v500
    %v517 = vadd.f32 %v501, %v502
    %v518 = vadd.f32 %v517, %v503
    %v519 = vadd.f32 %v518, %v504
    %v520 = vadd.f32 %v519, %v505
    %v521 = vadd.f32 %v520, %v506
    %v522 = vadd.f32 %v521, %v507
    %v523 = vadd.f32 %v522, %v508
    %524 = vadd.xlane.f32.xlu0 %v523
    %v525 = vpop.xlane.xlu0 %524
    %v526 = vadd.f32 %v509, %v510
    %v527 = vadd.f32 %v526, %v511
    %v528 = vadd.f32 %v527, %v512
    %v529 = vadd.f32 %v528, %v513
    %v530 = vadd.f32 %v529, %v514
    %v531 = vadd.f32 %v530, %v515
    %v532 = vadd.f32 %v531, %v516
    %533 = vadd.xlane.f32.xlu0 %v532
    %v534 = vpop.xlane.xlu0 %533
    %v535 = vld [vmem:[#allocation8] sm:$0xff]
    %v536 = vld [vmem:[#allocation8 + $0x8] sm:$0xff]
    %v537 = vld [vmem:[#allocation8 + $0x10] sm:$0xff]
    %v538 = vld [vmem:[#allocation8 + $0x18] sm:$0xff]
    %v539 = vld [vmem:[#allocation8 + $0x20] sm:$0xff]
    %v540 = vld [vmem:[#allocation8 + $0x28] sm:$0xff]
    %v541 = vld [vmem:[#allocation8 + $0x30] sm:$0xff]
    %v542 = vld [vmem:[#allocation8 + $0x38] sm:$0xff]
    %v543 = vld [vmem:[#allocation8 + $0x40] sm:$0xff]
    %v544 = vld [vmem:[#allocation8 + $0x48] sm:$0xff]
    %v545 = vld [vmem:[#allocation8 + $0x50] sm:$0xff]
    %v546 = vld [vmem:[#allocation8 + $0x58] sm:$0xff]
    %v547 = vld [vmem:[#allocation8 + $0x60] sm:$0xff]
    %v548 = vld [vmem:[#allocation8 + $0x68] sm:$0xff]
    %v549 = vld [vmem:[#allocation8 + $0x70] sm:$0xff]
    %v550 = vld [vmem:[#allocation8 + $0x78] sm:$0xff]
    %v551 = vld [vmem:[#allocation8 + $0x80] sm:$0xff]
    %v552 = vld [vmem:[#allocation8 + $0x88] sm:$0xff]
    %v553 = vld [vmem:[#allocation8 + $0x90] sm:$0xff]
    %v554 = vld [vmem:[#allocation8 + $0x98] sm:$0xff]
    %v555 = vld [vmem:[#allocation8 + $0xa0] sm:$0xff]
    %v556 = vld [vmem:[#allocation8 + $0xa8] sm:$0xff]
    %v557 = vld [vmem:[#allocation8 + $0xb0] sm:$0xff]
    %v558 = vld [vmem:[#allocation8 + $0xb8] sm:$0xff]
    %v559 = vld [vmem:[#allocation8 + $0xc0] sm:$0xff]
    %v560 = vld [vmem:[#allocation8 + $0xc8] sm:$0xff]
    %v561 = vld [vmem:[#allocation8 + $0xd0] sm:$0xff]
    %v562 = vld [vmem:[#allocation8 + $0xd8] sm:$0xff]
    %v563 = vld [vmem:[#allocation8 + $0xe0] sm:$0xff]
    %v564 = vld [vmem:[#allocation8 + $0xe8] sm:$0xff]
    %v565 = vld [vmem:[#allocation8 + $0xf0] sm:$0xff]
    %v566 = vld [vmem:[#allocation8 + $0xf8] sm:$0xff]
    %v567 = vld [vmem:[#allocation8 + $0x100] sm:$0xff]
    %v568 = vld [vmem:[#allocation8 + $0x108] sm:$0xff]
    %v569 = vld [vmem:[#allocation8 + $0x110] sm:$0xff]
    %v570 = vld [vmem:[#allocation8 + $0x118] sm:$0xff]
    %v571 = vld [vmem:[#allocation8 + $0x120] sm:$0xff]
    %v572 = vld [vmem:[#allocation8 + $0x128] sm:$0xff]
    %v573 = vld [vmem:[#allocation8 + $0x130] sm:$0xff]
    %v574 = vld [vmem:[#allocation8 + $0x138] sm:$0xff]
    %v575 = vld [vmem:[#allocation8 + $0x140] sm:$0xff]
    %v576 = vld [vmem:[#allocation8 + $0x148] sm:$0xff]
    %v577 = vld [vmem:[#allocation8 + $0x150] sm:$0xff]
    %v578 = vld [vmem:[#allocation8 + $0x158] sm:$0xff]
    %v579 = vld [vmem:[#allocation8 + $0x160] sm:$0xff]
    %v580 = vld [vmem:[#allocation8 + $0x168] sm:$0xff]
    %v581 = vld [vmem:[#allocation8 + $0x170] sm:$0xff]
    %v582 = vld [vmem:[#allocation8 + $0x178] sm:$0xff]
    %v583 = vld [vmem:[#allocation8 + $0x180] sm:$0xff]
    %v584 = vld [vmem:[#allocation8 + $0x188] sm:$0xff]
    %v585 = vld [vmem:[#allocation8 + $0x190] sm:$0xff]
    %v586 = vld [vmem:[#allocation8 + $0x198] sm:$0xff]
    %v587 = vld [vmem:[#allocation8 + $0x1a0] sm:$0xff]
    %v588 = vld [vmem:[#allocation8 + $0x1a8] sm:$0xff]
    %v589 = vld [vmem:[#allocation8 + $0x1b0] sm:$0xff]
    %v590 = vld [vmem:[#allocation8 + $0x1b8] sm:$0xff]
    %v591 = vld [vmem:[#allocation8 + $0x1c0] sm:$0xff]
    %v592 = vld [vmem:[#allocation8 + $0x1c8] sm:$0xff]
    %v593 = vld [vmem:[#allocation8 + $0x1d0] sm:$0xff]
    %v594 = vld [vmem:[#allocation8 + $0x1d8] sm:$0xff]
    %v595 = vld [vmem:[#allocation8 + $0x1e0] sm:$0xff]
    %v596 = vld [vmem:[#allocation8 + $0x1e8] sm:$0xff]
    %v597 = vld [vmem:[#allocation8 + $0x1f0] sm:$0xff]
    %v598 = vld [vmem:[#allocation8 + $0x1f8] sm:$0xff]
    %v599 = vld [vmem:[#allocation8 + $0x200] sm:$0xff]
    %v600 = vld [vmem:[#allocation8 + $0x208] sm:$0xff]
    %v601 = vld [vmem:[#allocation8 + $0x210] sm:$0xff]
    %v602 = vld [vmem:[#allocation8 + $0x218] sm:$0xff]
    %v603 = vld [vmem:[#allocation8 + $0x220] sm:$0xff]
    %v604 = vld [vmem:[#allocation8 + $0x228] sm:$0xff]
    %v605 = vld [vmem:[#allocation8 + $0x230] sm:$0xff]
    %v606 = vld [vmem:[#allocation8 + $0x238] sm:$0xff]
    %v607 = vld [vmem:[#allocation8 + $0x240] sm:$0xff]
    %v608 = vld [vmem:[#allocation8 + $0x248] sm:$0xff]
    %v609 = vld [vmem:[#allocation8 + $0x250] sm:$0xff]
    %v610 = vld [vmem:[#allocation8 + $0x258] sm:$0xff]
    %v611 = vld [vmem:[#allocation8 + $0x260] sm:$0xff]
    %v612 = vld [vmem:[#allocation8 + $0x268] sm:$0xff]
    %v613 = vld [vmem:[#allocation8 + $0x270] sm:$0xff]
    %v614 = vld [vmem:[#allocation8 + $0x278] sm:$0xff]
    %v615 = vld [vmem:[#allocation8 + $0x280] sm:$0xff]
    %v616 = vld [vmem:[#allocation8 + $0x288] sm:$0xff]
    %v617 = vld [vmem:[#allocation8 + $0x290] sm:$0xff]
    %v618 = vld [vmem:[#allocation8 + $0x298] sm:$0xff]
    %v619 = vld [vmem:[#allocation8 + $0x2a0] sm:$0xff]
    %v620 = vld [vmem:[#allocation8 + $0x2a8] sm:$0xff]
    %v621 = vld [vmem:[#allocation8 + $0x2b0] sm:$0xff]
    %v622 = vld [vmem:[#allocation8 + $0x2b8] sm:$0xff]
    %v623 = vld [vmem:[#allocation8 + $0x2c0] sm:$0xff]
    %v624 = vld [vmem:[#allocation8 + $0x2c8] sm:$0xff]
    %v625 = vld [vmem:[#allocation8 + $0x2d0] sm:$0xff]
    %v626 = vld [vmem:[#allocation8 + $0x2d8] sm:$0xff]
    %v627 = vld [vmem:[#allocation8 + $0x2e0] sm:$0xff]
    %v628 = vld [vmem:[#allocation8 + $0x2e8] sm:$0xff]
    %v629 = vld [vmem:[#allocation8 + $0x2f0] sm:$0xff]
    %v630 = vld [vmem:[#allocation8 + $0x2f8] sm:$0xff]
    %v631 = vld [vmem:[#allocation8 + $0x300] sm:$0xff]
    %v632 = vld [vmem:[#allocation8 + $0x308] sm:$0xff]
    %v633 = vld [vmem:[#allocation8 + $0x310] sm:$0xff]
    %v634 = vld [vmem:[#allocation8 + $0x318] sm:$0xff]
    %v635 = vld [vmem:[#allocation8 + $0x320] sm:$0xff]
    %v636 = vld [vmem:[#allocation8 + $0x328] sm:$0xff]
    %v637 = vld [vmem:[#allocation8 + $0x330] sm:$0xff]
    %v638 = vld [vmem:[#allocation8 + $0x338] sm:$0xff]
    %v639 = vld [vmem:[#allocation8 + $0x340] sm:$0xff]
    %v640 = vld [vmem:[#allocation8 + $0x348] sm:$0xff]
    %v641 = vld [vmem:[#allocation8 + $0x350] sm:$0xff]
    %v642 = vld [vmem:[#allocation8 + $0x358] sm:$0xff]
    %v643 = vld [vmem:[#allocation8 + $0x360] sm:$0xff]
    %v644 = vld [vmem:[#allocation8 + $0x368] sm:$0xff]
    %v645 = vld [vmem:[#allocation8 + $0x370] sm:$0xff]
    %v646 = vld [vmem:[#allocation8 + $0x378] sm:$0xff]
    %v647 = vld [vmem:[#allocation8 + $0x380] sm:$0xff]
    %v648 = vld [vmem:[#allocation8 + $0x388] sm:$0xff]
    %v649 = vld [vmem:[#allocation8 + $0x390] sm:$0xff]
    %v650 = vld [vmem:[#allocation8 + $0x398] sm:$0xff]
    %v651 = vld [vmem:[#allocation8 + $0x3a0] sm:$0xff]
    %v652 = vld [vmem:[#allocation8 + $0x3a8] sm:$0xff]
    %v653 = vld [vmem:[#allocation8 + $0x3b0] sm:$0xff]
    %v654 = vld [vmem:[#allocation8 + $0x3b8] sm:$0xff]
    %v655 = vld [vmem:[#allocation8 + $0x3c0] sm:$0xff]
    %v656 = vld [vmem:[#allocation8 + $0x3c8] sm:$0xff]
    %v657 = vld [vmem:[#allocation8 + $0x3d0] sm:$0xff]
    %v658 = vld [vmem:[#allocation8 + $0x3d8] sm:$0xff]
    %v659 = vld [vmem:[#allocation8 + $0x3e0] sm:$0xff]
    %v660 = vld [vmem:[#allocation8 + $0x3e8] sm:$0xff]
    %v661 = vld [vmem:[#allocation8 + $0x3f0] sm:$0xff]
    %v662 = vld [vmem:[#allocation8 + $0x3f8] sm:$0xff]
    %v663 = vld [vmem:[#allocation8 + $0x400] sm:$0xff]
    %v664 = vld [vmem:[#allocation8 + $0x408] sm:$0xff]
    %v665 = vld [vmem:[#allocation8 + $0x410] sm:$0xff]
    %v666 = vld [vmem:[#allocation8 + $0x418] sm:$0xff]
    %v667 = vld [vmem:[#allocation8 + $0x420] sm:$0xff]
    %v668 = vld [vmem:[#allocation8 + $0x428] sm:$0xff]
    %v669 = vld [vmem:[#allocation8 + $0x430] sm:$0xff]
    %v670 = vld [vmem:[#allocation8 + $0x438] sm:$0xff]
    %v671 = vld [vmem:[#allocation8 + $0x440] sm:$0xff]
    %v672 = vld [vmem:[#allocation8 + $0x448] sm:$0xff]
    %v673 = vld [vmem:[#allocation8 + $0x450] sm:$0xff]
    %v674 = vld [vmem:[#allocation8 + $0x458] sm:$0xff]
    %v675 = vld [vmem:[#allocation8 + $0x460] sm:$0xff]
    %v676 = vld [vmem:[#allocation8 + $0x468] sm:$0xff]
    %v677 = vld [vmem:[#allocation8 + $0x470] sm:$0xff]
    %v678 = vld [vmem:[#allocation8 + $0x478] sm:$0xff]
    %v679 = vld [vmem:[#allocation8 + $0x480] sm:$0xff]
    %v680 = vld [vmem:[#allocation8 + $0x488] sm:$0xff]
    %v681 = vld [vmem:[#allocation8 + $0x490] sm:$0xff]
    %v682 = vld [vmem:[#allocation8 + $0x498] sm:$0xff]
    %v683 = vld [vmem:[#allocation8 + $0x4a0] sm:$0xff]
    %v684 = vld [vmem:[#allocation8 + $0x4a8] sm:$0xff]
    %v685 = vld [vmem:[#allocation8 + $0x4b0] sm:$0xff]
    %v686 = vld [vmem:[#allocation8 + $0x4b8] sm:$0xff]
    %v687 = vld [vmem:[#allocation8 + $0x4c0] sm:$0xff]
    %v688 = vld [vmem:[#allocation8 + $0x4c8] sm:$0xff]
    %v689 = vld [vmem:[#allocation8 + $0x4d0] sm:$0xff]
    %v690 = vld [vmem:[#allocation8 + $0x4d8] sm:$0xff]
    %v691 = vld [vmem:[#allocation8 + $0x4e0] sm:$0xff]
    %v692 = vld [vmem:[#allocation8 + $0x4e8] sm:$0xff]
    %v693 = vld [vmem:[#allocation8 + $0x4f0] sm:$0xff]
    %v694 = vld [vmem:[#allocation8 + $0x4f8] sm:$0xff]
    %v695 = vld [vmem:[#allocation8 + $0x500] sm:$0xff]
    %v696 = vld [vmem:[#allocation8 + $0x508] sm:$0xff]
    %v697 = vld [vmem:[#allocation8 + $0x510] sm:$0xff]
    %v698 = vld [vmem:[#allocation8 + $0x518] sm:$0xff]
    %v699 = vld [vmem:[#allocation8 + $0x520] sm:$0xff]
    %v700 = vld [vmem:[#allocation8 + $0x528] sm:$0xff]
    %v701 = vld [vmem:[#allocation8 + $0x530] sm:$0xff]
    %v702 = vld [vmem:[#allocation8 + $0x538] sm:$0xff]
    %v703 = vld [vmem:[#allocation8 + $0x540] sm:$0xff]
    %v704 = vld [vmem:[#allocation8 + $0x548] sm:$0xff]
    %v705 = vld [vmem:[#allocation8 + $0x550] sm:$0xff]
    %v706 = vld [vmem:[#allocation8 + $0x558] sm:$0xff]
    %v707 = vld [vmem:[#allocation8 + $0x560] sm:$0xff]
    %v708 = vld [vmem:[#allocation8 + $0x568] sm:$0xff]
    %v709 = vld [vmem:[#allocation8 + $0x570] sm:$0xff]
    %v710 = vld [vmem:[#allocation8 + $0x578] sm:$0xff]
    %v711 = vld [vmem:[#allocation8 + $0x580] sm:$0xff]
    %v712 = vld [vmem:[#allocation8 + $0x588] sm:$0xff]
    %v713 = vld [vmem:[#allocation8 + $0x590] sm:$0xff]
    %v714 = vld [vmem:[#allocation8 + $0x598] sm:$0xff]
    %v715 = vld [vmem:[#allocation8 + $0x5a0] sm:$0xff]
    %v716 = vld [vmem:[#allocation8 + $0x5a8] sm:$0xff]
    %v717 = vld [vmem:[#allocation8 + $0x5b0] sm:$0xff]
    %v718 = vld [vmem:[#allocation8 + $0x5b8] sm:$0xff]
    %v719 = vld [vmem:[#allocation8 + $0x5c0] sm:$0xff]
    %v720 = vld [vmem:[#allocation8 + $0x5c8] sm:$0xff]
    %v721 = vld [vmem:[#allocation8 + $0x5d0] sm:$0xff]
    %v722 = vld [vmem:[#allocation8 + $0x5d8] sm:$0xff]
    %v723 = vld [vmem:[#allocation8 + $0x5e0] sm:$0xff]
    %v724 = vld [vmem:[#allocation8 + $0x5e8] sm:$0xff]
    %v725 = vld [vmem:[#allocation8 + $0x5f0] sm:$0xff]
    %v726 = vld [vmem:[#allocation8 + $0x5f8] sm:$0xff]
    %v727 = vld [vmem:[#allocation8 + $0x600] sm:$0xff]
    %v728 = vld [vmem:[#allocation8 + $0x608] sm:$0xff]
    %v729 = vld [vmem:[#allocation8 + $0x610] sm:$0xff]
    %v730 = vld [vmem:[#allocation8 + $0x618] sm:$0xff]
    %v731 = vld [vmem:[#allocation8 + $0x620] sm:$0xff]
    %v732 = vld [vmem:[#allocation8 + $0x628] sm:$0xff]
    %v733 = vld [vmem:[#allocation8 + $0x630] sm:$0xff]
    %v734 = vld [vmem:[#allocation8 + $0x638] sm:$0xff]
    %v735 = vld [vmem:[#allocation8 + $0x640] sm:$0xff]
    %v736 = vld [vmem:[#allocation8 + $0x648] sm:$0xff]
    %v737 = vld [vmem:[#allocation8 + $0x650] sm:$0xff]
    %v738 = vld [vmem:[#allocation8 + $0x658] sm:$0xff]
    %v739 = vld [vmem:[#allocation8 + $0x660] sm:$0xff]
    %v740 = vld [vmem:[#allocation8 + $0x668] sm:$0xff]
    %v741 = vld [vmem:[#allocation8 + $0x670] sm:$0xff]
    %v742 = vld [vmem:[#allocation8 + $0x678] sm:$0xff]
    %v743 = vld [vmem:[#allocation8 + $0x680] sm:$0xff]
    %v744 = vld [vmem:[#allocation8 + $0x688] sm:$0xff]
    %v745 = vld [vmem:[#allocation8 + $0x690] sm:$0xff]
    %v746 = vld [vmem:[#allocation8 + $0x698] sm:$0xff]
    %v747 = vld [vmem:[#allocation8 + $0x6a0] sm:$0xff]
    %v748 = vld [vmem:[#allocation8 + $0x6a8] sm:$0xff]
    %v749 = vld [vmem:[#allocation8 + $0x6b0] sm:$0xff]
    %v750 = vld [vmem:[#allocation8 + $0x6b8] sm:$0xff]
    %v751 = vld [vmem:[#allocation8 + $0x6c0] sm:$0xff]
    %v752 = vld [vmem:[#allocation8 + $0x6c8] sm:$0xff]
    %v753 = vld [vmem:[#allocation8 + $0x6d0] sm:$0xff]
    %v754 = vld [vmem:[#allocation8 + $0x6d8] sm:$0xff]
    %v755 = vld [vmem:[#allocation8 + $0x6e0] sm:$0xff]
    %v756 = vld [vmem:[#allocation8 + $0x6e8] sm:$0xff]
    %v757 = vld [vmem:[#allocation8 + $0x6f0] sm:$0xff]
    %v758 = vld [vmem:[#allocation8 + $0x6f8] sm:$0xff]
    %v759 = vld [vmem:[#allocation8 + $0x700] sm:$0xff]
    %v760 = vld [vmem:[#allocation8 + $0x708] sm:$0xff]
    %v761 = vld [vmem:[#allocation8 + $0x710] sm:$0xff]
    %v762 = vld [vmem:[#allocation8 + $0x718] sm:$0xff]
    %v763 = vld [vmem:[#allocation8 + $0x720] sm:$0xff]
    %v764 = vld [vmem:[#allocation8 + $0x728] sm:$0xff]
    %v765 = vld [vmem:[#allocation8 + $0x730] sm:$0xff]
    %v766 = vld [vmem:[#allocation8 + $0x738] sm:$0xff]
    %v767 = vld [vmem:[#allocation8 + $0x740] sm:$0xff]
    %v768 = vld [vmem:[#allocation8 + $0x748] sm:$0xff]
    %v769 = vld [vmem:[#allocation8 + $0x750] sm:$0xff]
    %v770 = vld [vmem:[#allocation8 + $0x758] sm:$0xff]
    %v771 = vld [vmem:[#allocation8 + $0x760] sm:$0xff]
    %v772 = vld [vmem:[#allocation8 + $0x768] sm:$0xff]
    %v773 = vld [vmem:[#allocation8 + $0x770] sm:$0xff]
    %v774 = vld [vmem:[#allocation8 + $0x778] sm:$0xff]
    %v775 = vld [vmem:[#allocation8 + $0x780] sm:$0xff]
    %v776 = vld [vmem:[#allocation8 + $0x788] sm:$0xff]
    %v777 = vld [vmem:[#allocation8 + $0x790] sm:$0xff]
    %v778 = vld [vmem:[#allocation8 + $0x798] sm:$0xff]
    %v779 = vld [vmem:[#allocation8 + $0x7a0] sm:$0xff]
    %v780 = vld [vmem:[#allocation8 + $0x7a8] sm:$0xff]
    %v781 = vld [vmem:[#allocation8 + $0x7b0] sm:$0xff]
    %v782 = vld [vmem:[#allocation8 + $0x7b8] sm:$0xff]
    %v783 = vld [vmem:[#allocation8 + $0x7c0] sm:$0xff]
    %v784 = vld [vmem:[#allocation8 + $0x7c8] sm:$0xff]
    %v785 = vld [vmem:[#allocation8 + $0x7d0] sm:$0xff]
    %v786 = vld [vmem:[#allocation8 + $0x7d8] sm:$0xff]
    %v787 = vld [vmem:[#allocation8 + $0x7e0] sm:$0xff]
    %v788 = vld [vmem:[#allocation8 + $0x7e8] sm:$0xff]
    %v789 = vld [vmem:[#allocation8 + $0x7f0] sm:$0xff]
    %v790 = vld [vmem:[#allocation8 + $0x7f8] sm:$0xff]
    %v1047 = vunpack.c.l.b16 %v535
    %v1048 = vunpack.c.h.b16 %v535
    %v1049 = vunpack.c.l.b16 %v536
    %v1050 = vunpack.c.h.b16 %v536
    %v1051 = vunpack.c.l.b16 %v537
    %v1052 = vunpack.c.h.b16 %v537
    %v1053 = vunpack.c.l.b16 %v538
    %v1054 = vunpack.c.h.b16 %v538
    %v1055 = vunpack.c.l.b16 %v539
    %v1056 = vunpack.c.h.b16 %v539
    %v1057 = vunpack.c.l.b16 %v540
    %v1058 = vunpack.c.h.b16 %v540
    %v1059 = vunpack.c.l.b16 %v541
    %v1060 = vunpack.c.h.b16 %v541
    %v1061 = vunpack.c.l.b16 %v542
    %v1062 = vunpack.c.h.b16 %v542
    %v1063 = vunpack.c.l.b16 %v543
    %v1064 = vunpack.c.h.b16 %v543
    %v1065 = vunpack.c.l.b16 %v544
    %v1066 = vunpack.c.h.b16 %v544
    %v1067 = vunpack.c.l.b16 %v545
    %v1068 = vunpack.c.h.b16 %v545
    %v1069 = vunpack.c.l.b16 %v546
    %v1070 = vunpack.c.h.b16 %v546
    %v1071 = vunpack.c.l.b16 %v547
    %v1072 = vunpack.c.h.b16 %v547
    %v1073 = vunpack.c.l.b16 %v548
    %v1074 = vunpack.c.h.b16 %v548
    %v1075 = vunpack.c.l.b16 %v549
    %v1076 = vunpack.c.h.b16 %v549
    %v1077 = vunpack.c.l.b16 %v550
    %v1078 = vunpack.c.h.b16 %v550
    %v1079 = vunpack.c.l.b16 %v551
    %v1080 = vunpack.c.h.b16 %v551
    %v1081 = vunpack.c.l.b16 %v552
    %v1082 = vunpack.c.h.b16 %v552
    %v1083 = vunpack.c.l.b16 %v553
    %v1084 = vunpack.c.h.b16 %v553
    %v1085 = vunpack.c.l.b16 %v554
    %v1086 = vunpack.c.h.b16 %v554
    %v1087 = vunpack.c.l.b16 %v555
    %v1088 = vunpack.c.h.b16 %v555
    %v1089 = vunpack.c.l.b16 %v556
    %v1090 = vunpack.c.h.b16 %v556
    %v1091 = vunpack.c.l.b16 %v557
    %v1092 = vunpack.c.h.b16 %v557
    %v1093 = vunpack.c.l.b16 %v558
    %v1094 = vunpack.c.h.b16 %v558
    %v1095 = vunpack.c.l.b16 %v559
    %v1096 = vunpack.c.h.b16 %v559
    %v1097 = vunpack.c.l.b16 %v560
    %v1098 = vunpack.c.h.b16 %v560
    %v1099 = vunpack.c.l.b16 %v561
    %v1100 = vunpack.c.h.b16 %v561
    %v1101 = vunpack.c.l.b16 %v562
    %v1102 = vunpack.c.h.b16 %v562
    %v1103 = vunpack.c.l.b16 %v563
    %v1104 = vunpack.c.h.b16 %v563
    %v1105 = vunpack.c.l.b16 %v564
    %v1106 = vunpack.c.h.b16 %v564
    %v1107 = vunpack.c.l.b16 %v565
    %v1108 = vunpack.c.h.b16 %v565
    %v1109 = vunpack.c.l.b16 %v566
    %v1110 = vunpack.c.h.b16 %v566
    %v1111 = vunpack.c.l.b16 %v567
    %v1112 = vunpack.c.h.b16 %v567
    %v1113 = vunpack.c.l.b16 %v568
    %v1114 = vunpack.c.h.b16 %v568
    %v1115 = vunpack.c.l.b16 %v569
    %v1116 = vunpack.c.h.b16 %v569
    %v1117 = vunpack.c.l.b16 %v570
    %v1118 = vunpack.c.h.b16 %v570
    %v1119 = vunpack.c.l.b16 %v571
    %v1120 = vunpack.c.h.b16 %v571
    %v1121 = vunpack.c.l.b16 %v572
    %v1122 = vunpack.c.h.b16 %v572
    %v1123 = vunpack.c.l.b16 %v573
    %v1124 = vunpack.c.h.b16 %v573
    %v1125 = vunpack.c.l.b16 %v574
    %v1126 = vunpack.c.h.b16 %v574
    %v1127 = vunpack.c.l.b16 %v575
    %v1128 = vunpack.c.h.b16 %v575
    %v1129 = vunpack.c.l.b16 %v576
    %v1130 = vunpack.c.h.b16 %v576
    %v1131 = vunpack.c.l.b16 %v577
    %v1132 = vunpack.c.h.b16 %v577
    %v1133 = vunpack.c.l.b16 %v578
    %v1134 = vunpack.c.h.b16 %v578
    %v1135 = vunpack.c.l.b16 %v579
    %v1136 = vunpack.c.h.b16 %v579
    %v1137 = vunpack.c.l.b16 %v580
    %v1138 = vunpack.c.h.b16 %v580
    %v1139 = vunpack.c.l.b16 %v581
    %v1140 = vunpack.c.h.b16 %v581
    %v1141 = vunpack.c.l.b16 %v582
    %v1142 = vunpack.c.h.b16 %v582
    %v1143 = vunpack.c.l.b16 %v583
    %v1144 = vunpack.c.h.b16 %v583
    %v1145 = vunpack.c.l.b16 %v584
    %v1146 = vunpack.c.h.b16 %v584
    %v1147 = vunpack.c.l.b16 %v585
    %v1148 = vunpack.c.h.b16 %v585
    %v1149 = vunpack.c.l.b16 %v586
    %v1150 = vunpack.c.h.b16 %v586
    %v1151 = vunpack.c.l.b16 %v587
    %v1152 = vunpack.c.h.b16 %v587
    %v1153 = vunpack.c.l.b16 %v588
    %v1154 = vunpack.c.h.b16 %v588
    %v1155 = vunpack.c.l.b16 %v589
    %v1156 = vunpack.c.h.b16 %v589
    %v1157 = vunpack.c.l.b16 %v590
    %v1158 = vunpack.c.h.b16 %v590
    %v1159 = vunpack.c.l.b16 %v591
    %v1160 = vunpack.c.h.b16 %v591
    %v1161 = vunpack.c.l.b16 %v592
    %v1162 = vunpack.c.h.b16 %v592
    %v1163 = vunpack.c.l.b16 %v593
    %v1164 = vunpack.c.h.b16 %v593
    %v1165 = vunpack.c.l.b16 %v594
    %v1166 = vunpack.c.h.b16 %v594
    %v1167 = vunpack.c.l.b16 %v595
    %v1168 = vunpack.c.h.b16 %v595
    %v1169 = vunpack.c.l.b16 %v596
    %v1170 = vunpack.c.h.b16 %v596
    %v1171 = vunpack.c.l.b16 %v597
    %v1172 = vunpack.c.h.b16 %v597
    %v1173 = vunpack.c.l.b16 %v598
    %v1174 = vunpack.c.h.b16 %v598
    %v1175 = vunpack.c.l.b16 %v599
    %v1176 = vunpack.c.h.b16 %v599
    %v1177 = vunpack.c.l.b16 %v600
    %v1178 = vunpack.c.h.b16 %v600
    %v1179 = vunpack.c.l.b16 %v601
    %v1180 = vunpack.c.h.b16 %v601
    %v1181 = vunpack.c.l.b16 %v602
    %v1182 = vunpack.c.h.b16 %v602
    %v1183 = vunpack.c.l.b16 %v603
    %v1184 = vunpack.c.h.b16 %v603
    %v1185 = vunpack.c.l.b16 %v604
    %v1186 = vunpack.c.h.b16 %v604
    %v1187 = vunpack.c.l.b16 %v605
    %v1188 = vunpack.c.h.b16 %v605
    %v1189 = vunpack.c.l.b16 %v606
    %v1190 = vunpack.c.h.b16 %v606
    %v1191 = vunpack.c.l.b16 %v607
    %v1192 = vunpack.c.h.b16 %v607
    %v1193 = vunpack.c.l.b16 %v608
    %v1194 = vunpack.c.h.b16 %v608
    %v1195 = vunpack.c.l.b16 %v609
    %v1196 = vunpack.c.h.b16 %v609
    %v1197 = vunpack.c.l.b16 %v610
    %v1198 = vunpack.c.h.b16 %v610
    %v1199 = vunpack.c.l.b16 %v611
    %v1200 = vunpack.c.h.b16 %v611
    %v1201 = vunpack.c.l.b16 %v612
    %v1202 = vunpack.c.h.b16 %v612
    %v1203 = vunpack.c.l.b16 %v613
    %v1204 = vunpack.c.h.b16 %v613
    %v1205 = vunpack.c.l.b16 %v614
    %v1206 = vunpack.c.h.b16 %v614
    %v1207 = vunpack.c.l.b16 %v615
    %v1208 = vunpack.c.h.b16 %v615
    %v1209 = vunpack.c.l.b16 %v616
    %v1210 = vunpack.c.h.b16 %v616
    %v1211 = vunpack.c.l.b16 %v617
    %v1212 = vunpack.c.h.b16 %v617
    %v1213 = vunpack.c.l.b16 %v618
    %v1214 = vunpack.c.h.b16 %v618
    %v1215 = vunpack.c.l.b16 %v619
    %v1216 = vunpack.c.h.b16 %v619
    %v1217 = vunpack.c.l.b16 %v620
    %v1218 = vunpack.c.h.b16 %v620
    %v1219 = vunpack.c.l.b16 %v621
    %v1220 = vunpack.c.h.b16 %v621
    %v1221 = vunpack.c.l.b16 %v622
    %v1222 = vunpack.c.h.b16 %v622
    %v1223 = vunpack.c.l.b16 %v623
    %v1224 = vunpack.c.h.b16 %v623
    %v1225 = vunpack.c.l.b16 %v624
    %v1226 = vunpack.c.h.b16 %v624
    %v1227 = vunpack.c.l.b16 %v625
    %v1228 = vunpack.c.h.b16 %v625
    %v1229 = vunpack.c.l.b16 %v626
    %v1230 = vunpack.c.h.b16 %v626
    %v1231 = vunpack.c.l.b16 %v627
    %v1232 = vunpack.c.h.b16 %v627
    %v1233 = vunpack.c.l.b16 %v628
    %v1234 = vunpack.c.h.b16 %v628
    %v1235 = vunpack.c.l.b16 %v629
    %v1236 = vunpack.c.h.b16 %v629
    %v1237 = vunpack.c.l.b16 %v630
    %v1238 = vunpack.c.h.b16 %v630
    %v1239 = vunpack.c.l.b16 %v631
    %v1240 = vunpack.c.h.b16 %v631
    %v1241 = vunpack.c.l.b16 %v632
    %v1242 = vunpack.c.h.b16 %v632
    %v1243 = vunpack.c.l.b16 %v633
    %v1244 = vunpack.c.h.b16 %v633
    %v1245 = vunpack.c.l.b16 %v634
    %v1246 = vunpack.c.h.b16 %v634
    %v1247 = vunpack.c.l.b16 %v635
    %v1248 = vunpack.c.h.b16 %v635
    %v1249 = vunpack.c.l.b16 %v636
    %v1250 = vunpack.c.h.b16 %v636
    %v1251 = vunpack.c.l.b16 %v637
    %v1252 = vunpack.c.h.b16 %v637
    %v1253 = vunpack.c.l.b16 %v638
    %v1254 = vunpack.c.h.b16 %v638
    %v1255 = vunpack.c.l.b16 %v639
    %v1256 = vunpack.c.h.b16 %v639
    %v1257 = vunpack.c.l.b16 %v640
    %v1258 = vunpack.c.h.b16 %v640
    %v1259 = vunpack.c.l.b16 %v641
    %v1260 = vunpack.c.h.b16 %v641
    %v1261 = vunpack.c.l.b16 %v642
    %v1262 = vunpack.c.h.b16 %v642
    %v1263 = vunpack.c.l.b16 %v643
    %v1264 = vunpack.c.h.b16 %v643
    %v1265 = vunpack.c.l.b16 %v644
    %v1266 = vunpack.c.h.b16 %v644
    %v1267 = vunpack.c.l.b16 %v645
    %v1268 = vunpack.c.h.b16 %v645
    %v1269 = vunpack.c.l.b16 %v646
    %v1270 = vunpack.c.h.b16 %v646
    %v1271 = vunpack.c.l.b16 %v647
    %v1272 = vunpack.c.h.b16 %v647
    %v1273 = vunpack.c.l.b16 %v648
    %v1274 = vunpack.c.h.b16 %v648
    %v1275 = vunpack.c.l.b16 %v649
    %v1276 = vunpack.c.h.b16 %v649
    %v1277 = vunpack.c.l.b16 %v650
    %v1278 = vunpack.c.h.b16 %v650
    %v1279 = vunpack.c.l.b16 %v651
    %v1280 = vunpack.c.h.b16 %v651
    %v1281 = vunpack.c.l.b16 %v652
    %v1282 = vunpack.c.h.b16 %v652
    %v1283 = vunpack.c.l.b16 %v653
    %v1284 = vunpack.c.h.b16 %v653
    %v1285 = vunpack.c.l.b16 %v654
    %v1286 = vunpack.c.h.b16 %v654
    %v1287 = vunpack.c.l.b16 %v655
    %v1288 = vunpack.c.h.b16 %v655
    %v1289 = vunpack.c.l.b16 %v656
    %v1290 = vunpack.c.h.b16 %v656
    %v1291 = vunpack.c.l.b16 %v657
    %v1292 = vunpack.c.h.b16 %v657
    %v1293 = vunpack.c.l.b16 %v658
    %v1294 = vunpack.c.h.b16 %v658
    %v1295 = vunpack.c.l.b16 %v659
    %v1296 = vunpack.c.h.b16 %v659
    %v1297 = vunpack.c.l.b16 %v660
    %v1298 = vunpack.c.h.b16 %v660
    %v1299 = vunpack.c.l.b16 %v661
    %v1300 = vunpack.c.h.b16 %v661
    %v1301 = vunpack.c.l.b16 %v662
    %v1302 = vunpack.c.h.b16 %v662
    %v1303 = vunpack.c.l.b16 %v663
    %v1304 = vunpack.c.h.b16 %v663
    %v1305 = vunpack.c.l.b16 %v664
    %v1306 = vunpack.c.h.b16 %v664
    %v1307 = vunpack.c.l.b16 %v665
    %v1308 = vunpack.c.h.b16 %v665
    %v1309 = vunpack.c.l.b16 %v666
    %v1310 = vunpack.c.h.b16 %v666
    %v1311 = vunpack.c.l.b16 %v667
    %v1312 = vunpack.c.h.b16 %v667
    %v1313 = vunpack.c.l.b16 %v668
    %v1314 = vunpack.c.h.b16 %v668
    %v1315 = vunpack.c.l.b16 %v669
    %v1316 = vunpack.c.h.b16 %v669
    %v1317 = vunpack.c.l.b16 %v670
    %v1318 = vunpack.c.h.b16 %v670
    %v1319 = vunpack.c.l.b16 %v671
    %v1320 = vunpack.c.h.b16 %v671
    %v1321 = vunpack.c.l.b16 %v672
    %v1322 = vunpack.c.h.b16 %v672
    %v1323 = vunpack.c.l.b16 %v673
    %v1324 = vunpack.c.h.b16 %v673
    %v1325 = vunpack.c.l.b16 %v674
    %v1326 = vunpack.c.h.b16 %v674
    %v1327 = vunpack.c.l.b16 %v675
    %v1328 = vunpack.c.h.b16 %v675
    %v1329 = vunpack.c.l.b16 %v676
    %v1330 = vunpack.c.h.b16 %v676
    %v1331 = vunpack.c.l.b16 %v677
    %v1332 = vunpack.c.h.b16 %v677
    %v1333 = vunpack.c.l.b16 %v678
    %v1334 = vunpack.c.h.b16 %v678
    %v1335 = vunpack.c.l.b16 %v679
    %v1336 = vunpack.c.h.b16 %v679
    %v1337 = vunpack.c.l.b16 %v680
    %v1338 = vunpack.c.h.b16 %v680
    %v1339 = vunpack.c.l.b16 %v681
    %v1340 = vunpack.c.h.b16 %v681
    %v1341 = vunpack.c.l.b16 %v682
    %v1342 = vunpack.c.h.b16 %v682
    %v1343 = vunpack.c.l.b16 %v683
    %v1344 = vunpack.c.h.b16 %v683
    %v1345 = vunpack.c.l.b16 %v684
    %v1346 = vunpack.c.h.b16 %v684
    %v1347 = vunpack.c.l.b16 %v685
    %v1348 = vunpack.c.h.b16 %v685
    %v1349 = vunpack.c.l.b16 %v686
    %v1350 = vunpack.c.h.b16 %v686
    %v1351 = vunpack.c.l.b16 %v687
    %v1352 = vunpack.c.h.b16 %v687
    %v1353 = vunpack.c.l.b16 %v688
    %v1354 = vunpack.c.h.b16 %v688
    %v1355 = vunpack.c.l.b16 %v689
    %v1356 = vunpack.c.h.b16 %v689
    %v1357 = vunpack.c.l.b16 %v690
    %v1358 = vunpack.c.h.b16 %v690
    %v1359 = vunpack.c.l.b16 %v691
    %v1360 = vunpack.c.h.b16 %v691
    %v1361 = vunpack.c.l.b16 %v692
    %v1362 = vunpack.c.h.b16 %v692
    %v1363 = vunpack.c.l.b16 %v693
    %v1364 = vunpack.c.h.b16 %v693
    %v1365 = vunpack.c.l.b16 %v694
    %v1366 = vunpack.c.h.b16 %v694
    %v1367 = vunpack.c.l.b16 %v695
    %v1368 = vunpack.c.h.b16 %v695
    %v1369 = vunpack.c.l.b16 %v696
    %v1370 = vunpack.c.h.b16 %v696
    %v1371 = vunpack.c.l.b16 %v697
    %v1372 = vunpack.c.h.b16 %v697
    %v1373 = vunpack.c.l.b16 %v698
    %v1374 = vunpack.c.h.b16 %v698
    %v1375 = vunpack.c.l.b16 %v699
    %v1376 = vunpack.c.h.b16 %v699
    %v1377 = vunpack.c.l.b16 %v700
    %v1378 = vunpack.c.h.b16 %v700
    %v1379 = vunpack.c.l.b16 %v701
    %v1380 = vunpack.c.h.b16 %v701
    %v1381 = vunpack.c.l.b16 %v702
    %v1382 = vunpack.c.h.b16 %v702
    %v1383 = vunpack.c.l.b16 %v703
    %v1384 = vunpack.c.h.b16 %v703
    %v1385 = vunpack.c.l.b16 %v704
    %v1386 = vunpack.c.h.b16 %v704
    %v1387 = vunpack.c.l.b16 %v705
    %v1388 = vunpack.c.h.b16 %v705
    %v1389 = vunpack.c.l.b16 %v706
    %v1390 = vunpack.c.h.b16 %v706
    %v1391 = vunpack.c.l.b16 %v707
    %v1392 = vunpack.c.h.b16 %v707
    %v1393 = vunpack.c.l.b16 %v708
    %v1394 = vunpack.c.h.b16 %v708
    %v1395 = vunpack.c.l.b16 %v709
    %v1396 = vunpack.c.h.b16 %v709
    %v1397 = vunpack.c.l.b16 %v710
    %v1398 = vunpack.c.h.b16 %v710
    %v1399 = vunpack.c.l.b16 %v711
    %v1400 = vunpack.c.h.b16 %v711
    %v1401 = vunpack.c.l.b16 %v712
    %v1402 = vunpack.c.h.b16 %v712
    %v1403 = vunpack.c.l.b16 %v713
    %v1404 = vunpack.c.h.b16 %v713
    %v1405 = vunpack.c.l.b16 %v714
    %v1406 = vunpack.c.h.b16 %v714
    %v1407 = vunpack.c.l.b16 %v715
    %v1408 = vunpack.c.h.b16 %v715
    %v1409 = vunpack.c.l.b16 %v716
    %v1410 = vunpack.c.h.b16 %v716
    %v1411 = vunpack.c.l.b16 %v717
    %v1412 = vunpack.c.h.b16 %v717
    %v1413 = vunpack.c.l.b16 %v718
    %v1414 = vunpack.c.h.b16 %v718
    %v1415 = vunpack.c.l.b16 %v719
    %v1416 = vunpack.c.h.b16 %v719
    %v1417 = vunpack.c.l.b16 %v720
    %v1418 = vunpack.c.h.b16 %v720
    %v1419 = vunpack.c.l.b16 %v721
    %v1420 = vunpack.c.h.b16 %v721
    %v1421 = vunpack.c.l.b16 %v722
    %v1422 = vunpack.c.h.b16 %v722
    %v1423 = vunpack.c.l.b16 %v723
    %v1424 = vunpack.c.h.b16 %v723
    %v1425 = vunpack.c.l.b16 %v724
    %v1426 = vunpack.c.h.b16 %v724
    %v1427 = vunpack.c.l.b16 %v725
    %v1428 = vunpack.c.h.b16 %v725
    %v1429 = vunpack.c.l.b16 %v726
    %v1430 = vunpack.c.h.b16 %v726
    %v1431 = vunpack.c.l.b16 %v727
    %v1432 = vunpack.c.h.b16 %v727
    %v1433 = vunpack.c.l.b16 %v728
    %v1434 = vunpack.c.h.b16 %v728
    %v1435 = vunpack.c.l.b16 %v729
    %v1436 = vunpack.c.h.b16 %v729
    %v1437 = vunpack.c.l.b16 %v730
    %v1438 = vunpack.c.h.b16 %v730
    %v1439 = vunpack.c.l.b16 %v731
    %v1440 = vunpack.c.h.b16 %v731
    %v1441 = vunpack.c.l.b16 %v732
    %v1442 = vunpack.c.h.b16 %v732
    %v1443 = vunpack.c.l.b16 %v733
    %v1444 = vunpack.c.h.b16 %v733
    %v1445 = vunpack.c.l.b16 %v734
    %v1446 = vunpack.c.h.b16 %v734
    %v1447 = vunpack.c.l.b16 %v735
    %v1448 = vunpack.c.h.b16 %v735
    %v1449 = vunpack.c.l.b16 %v736
    %v1450 = vunpack.c.h.b16 %v736
    %v1451 = vunpack.c.l.b16 %v737
    %v1452 = vunpack.c.h.b16 %v737
    %v1453 = vunpack.c.l.b16 %v738
    %v1454 = vunpack.c.h.b16 %v738
    %v1455 = vunpack.c.l.b16 %v739
    %v1456 = vunpack.c.h.b16 %v739
    %v1457 = vunpack.c.l.b16 %v740
    %v1458 = vunpack.c.h.b16 %v740
    %v1459 = vunpack.c.l.b16 %v741
    %v1460 = vunpack.c.h.b16 %v741
    %v1461 = vunpack.c.l.b16 %v742
    %v1462 = vunpack.c.h.b16 %v742
    %v1463 = vunpack.c.l.b16 %v743
    %v1464 = vunpack.c.h.b16 %v743
    %v1465 = vunpack.c.l.b16 %v744
    %v1466 = vunpack.c.h.b16 %v744
    %v1467 = vunpack.c.l.b16 %v745
    %v1468 = vunpack.c.h.b16 %v745
    %v1469 = vunpack.c.l.b16 %v746
    %v1470 = vunpack.c.h.b16 %v746
    %v1471 = vunpack.c.l.b16 %v747
    %v1472 = vunpack.c.h.b16 %v747
    %v1473 = vunpack.c.l.b16 %v748
    %v1474 = vunpack.c.h.b16 %v748
    %v1475 = vunpack.c.l.b16 %v749
    %v1476 = vunpack.c.h.b16 %v749
    %v1477 = vunpack.c.l.b16 %v750
    %v1478 = vunpack.c.h.b16 %v750
    %v1479 = vunpack.c.l.b16 %v751
    %v1480 = vunpack.c.h.b16 %v751
    %v1481 = vunpack.c.l.b16 %v752
    %v1482 = vunpack.c.h.b16 %v752
    %v1483 = vunpack.c.l.b16 %v753
    %v1484 = vunpack.c.h.b16 %v753
    %v1485 = vunpack.c.l.b16 %v754
    %v1486 = vunpack.c.h.b16 %v754
    %v1487 = vunpack.c.l.b16 %v755
    %v1488 = vunpack.c.h.b16 %v755
    %v1489 = vunpack.c.l.b16 %v756
    %v1490 = vunpack.c.h.b16 %v756
    %v1491 = vunpack.c.l.b16 %v757
    %v1492 = vunpack.c.h.b16 %v757
    %v1493 = vunpack.c.l.b16 %v758
    %v1494 = vunpack.c.h.b16 %v758
    %v1495 = vunpack.c.l.b16 %v759
    %v1496 = vunpack.c.h.b16 %v759
    %v1497 = vunpack.c.l.b16 %v760
    %v1498 = vunpack.c.h.b16 %v760
    %v1499 = vunpack.c.l.b16 %v761
    %v1500 = vunpack.c.h.b16 %v761
    %v1501 = vunpack.c.l.b16 %v762
    %v1502 = vunpack.c.h.b16 %v762
    %v1503 = vunpack.c.l.b16 %v763
    %v1504 = vunpack.c.h.b16 %v763
    %v1505 = vunpack.c.l.b16 %v764
    %v1506 = vunpack.c.h.b16 %v764
    %v1507 = vunpack.c.l.b16 %v765
    %v1508 = vunpack.c.h.b16 %v765
    %v1509 = vunpack.c.l.b16 %v766
    %v1510 = vunpack.c.h.b16 %v766
    %v1511 = vunpack.c.l.b16 %v767
    %v1512 = vunpack.c.h.b16 %v767
    %v1513 = vunpack.c.l.b16 %v768
    %v1514 = vunpack.c.h.b16 %v768
    %v1515 = vunpack.c.l.b16 %v769
    %v1516 = vunpack.c.h.b16 %v769
    %v1517 = vunpack.c.l.b16 %v770
    %v1518 = vunpack.c.h.b16 %v770
    %v1519 = vunpack.c.l.b16 %v771
    %v1520 = vunpack.c.h.b16 %v771
    %v1521 = vunpack.c.l.b16 %v772
    %v1522 = vunpack.c.h.b16 %v772
    %v1523 = vunpack.c.l.b16 %v773
    %v1524 = vunpack.c.h.b16 %v773
    %v1525 = vunpack.c.l.b16 %v774
    %v1526 = vunpack.c.h.b16 %v774
    %v1527 = vunpack.c.l.b16 %v775
    %v1528 = vunpack.c.h.b16 %v775
    %v1529 = vunpack.c.l.b16 %v776
    %v1530 = vunpack.c.h.b16 %v776
    %v1531 = vunpack.c.l.b16 %v777
    %v1532 = vunpack.c.h.b16 %v777
    %v1533 = vunpack.c.l.b16 %v778
    %v1534 = vunpack.c.h.b16 %v778
    %v1535 = vunpack.c.l.b16 %v779
    %v1536 = vunpack.c.h.b16 %v779
    %v1537 = vunpack.c.l.b16 %v780
    %v1538 = vunpack.c.h.b16 %v780
    %v1539 = vunpack.c.l.b16 %v781
    %v1540 = vunpack.c.h.b16 %v781
    %v1541 = vunpack.c.l.b16 %v782
    %v1542 = vunpack.c.h.b16 %v782
    %v1543 = vunpack.c.l.b16 %v783
    %v1544 = vunpack.c.h.b16 %v783
    %v1545 = vunpack.c.l.b16 %v784
    %v1546 = vunpack.c.h.b16 %v784
    %v1547 = vunpack.c.l.b16 %v785
    %v1548 = vunpack.c.h.b16 %v785
    %v1549 = vunpack.c.l.b16 %v786
    %v1550 = vunpack.c.h.b16 %v786
    %v1551 = vunpack.c.l.b16 %v787
    %v1552 = vunpack.c.h.b16 %v787
    %v1553 = vunpack.c.l.b16 %v788
    %v1554 = vunpack.c.h.b16 %v788
    %v1555 = vunpack.c.l.b16 %v789
    %v1556 = vunpack.c.h.b16 %v789
    %v1557 = vunpack.c.l.b16 %v790
    %v1558 = vunpack.c.h.b16 %v790
    %v1559 = vpack.c.b16 %v1051, %v1047
    %v1560 = vpack.c.b16 %v1052, %v1048
    %v1561 = vpack.c.b16 %v1053, %v1049
    %v1562 = vpack.c.b16 %v1054, %v1050
    %v1563 = vpack.c.b16 %v1059, %v1055
    %v1564 = vpack.c.b16 %v1060, %v1056
    %v1565 = vpack.c.b16 %v1061, %v1057
    %v1566 = vpack.c.b16 %v1062, %v1058
    %v1567 = vpack.c.b16 %v1067, %v1063
    %v1568 = vpack.c.b16 %v1068, %v1064
    %v1569 = vpack.c.b16 %v1069, %v1065
    %v1570 = vpack.c.b16 %v1070, %v1066
    %v1571 = vpack.c.b16 %v1075, %v1071
    %v1572 = vpack.c.b16 %v1076, %v1072
    %v1573 = vpack.c.b16 %v1077, %v1073
    %v1574 = vpack.c.b16 %v1078, %v1074
    %v1575 = vpack.c.b16 %v1083, %v1079
    %v1576 = vpack.c.b16 %v1084, %v1080
    %v1577 = vpack.c.b16 %v1085, %v1081
    %v1578 = vpack.c.b16 %v1086, %v1082
    %v1579 = vpack.c.b16 %v1091, %v1087
    %v1580 = vpack.c.b16 %v1092, %v1088
    %v1581 = vpack.c.b16 %v1093, %v1089
    %v1582 = vpack.c.b16 %v1094, %v1090
    %v1583 = vpack.c.b16 %v1099, %v1095
    %v1584 = vpack.c.b16 %v1100, %v1096
    %v1585 = vpack.c.b16 %v1101, %v1097
    %v1586 = vpack.c.b16 %v1102, %v1098
    %v1587 = vpack.c.b16 %v1107, %v1103
    %v1588 = vpack.c.b16 %v1108, %v1104
    %v1589 = vpack.c.b16 %v1109, %v1105
    %v1590 = vpack.c.b16 %v1110, %v1106
    %v1591 = vpack.c.b16 %v1115, %v1111
    %v1592 = vpack.c.b16 %v1116, %v1112
    %v1593 = vpack.c.b16 %v1117, %v1113
    %v1594 = vpack.c.b16 %v1118, %v1114
    %v1595 = vpack.c.b16 %v1123, %v1119
    %v1596 = vpack.c.b16 %v1124, %v1120
    %v1597 = vpack.c.b16 %v1125, %v1121
    %v1598 = vpack.c.b16 %v1126, %v1122
    %v1599 = vpack.c.b16 %v1131, %v1127
    %v1600 = vpack.c.b16 %v1132, %v1128
    %v1601 = vpack.c.b16 %v1133, %v1129
    %v1602 = vpack.c.b16 %v1134, %v1130
    %v1603 = vpack.c.b16 %v1139, %v1135
    %v1604 = vpack.c.b16 %v1140, %v1136
    %v1605 = vpack.c.b16 %v1141, %v1137
    %v1606 = vpack.c.b16 %v1142, %v1138
    %v1607 = vpack.c.b16 %v1147, %v1143
    %v1608 = vpack.c.b16 %v1148, %v1144
    %v1609 = vpack.c.b16 %v1149, %v1145
    %v1610 = vpack.c.b16 %v1150, %v1146
    %v1611 = vpack.c.b16 %v1155, %v1151
    %v1612 = vpack.c.b16 %v1156, %v1152
    %v1613 = vpack.c.b16 %v1157, %v1153
    %v1614 = vpack.c.b16 %v1158, %v1154
    %v1615 = vpack.c.b16 %v1163, %v1159
    %v1616 = vpack.c.b16 %v1164, %v1160
    %v1617 = vpack.c.b16 %v1165, %v1161
    %v1618 = vpack.c.b16 %v1166, %v1162
    %v1619 = vpack.c.b16 %v1171, %v1167
    %v1620 = vpack.c.b16 %v1172, %v1168
    %v1621 = vpack.c.b16 %v1173, %v1169
    %v1622 = vpack.c.b16 %v1174, %v1170
    %v1623 = vpack.c.b16 %v1179, %v1175
    %v1624 = vpack.c.b16 %v1180, %v1176
    %v1625 = vpack.c.b16 %v1181, %v1177
    %v1626 = vpack.c.b16 %v1182, %v1178
    %v1627 = vpack.c.b16 %v1187, %v1183
    %v1628 = vpack.c.b16 %v1188, %v1184
    %v1629 = vpack.c.b16 %v1189, %v1185
    %v1630 = vpack.c.b16 %v1190, %v1186
    %v1631 = vpack.c.b16 %v1195, %v1191
    %v1632 = vpack.c.b16 %v1196, %v1192
    %v1633 = vpack.c.b16 %v1197, %v1193
    %v1634 = vpack.c.b16 %v1198, %v1194
    %v1635 = vpack.c.b16 %v1203, %v1199
    %v1636 = vpack.c.b16 %v1204, %v1200
    %v1637 = vpack.c.b16 %v1205, %v1201
    %v1638 = vpack.c.b16 %v1206, %v1202
    %v1639 = vpack.c.b16 %v1211, %v1207
    %v1640 = vpack.c.b16 %v1212, %v1208
    %v1641 = vpack.c.b16 %v1213, %v1209
    %v1642 = vpack.c.b16 %v1214, %v1210
    %v1643 = vpack.c.b16 %v1219, %v1215
    %v1644 = vpack.c.b16 %v1220, %v1216
    %v1645 = vpack.c.b16 %v1221, %v1217
    %v1646 = vpack.c.b16 %v1222, %v1218
    %v1647 = vpack.c.b16 %v1227, %v1223
    %v1648 = vpack.c.b16 %v1228, %v1224
    %v1649 = vpack.c.b16 %v1229, %v1225
    %v1650 = vpack.c.b16 %v1230, %v1226
    %v1651 = vpack.c.b16 %v1235, %v1231
    %v1652 = vpack.c.b16 %v1236, %v1232
    %v1653 = vpack.c.b16 %v1237, %v1233
    %v1654 = vpack.c.b16 %v1238, %v1234
    %v1655 = vpack.c.b16 %v1243, %v1239
    %v1656 = vpack.c.b16 %v1244, %v1240
    %v1657 = vpack.c.b16 %v1245, %v1241
    %v1658 = vpack.c.b16 %v1246, %v1242
    %v1659 = vpack.c.b16 %v1251, %v1247
    %v1660 = vpack.c.b16 %v1252, %v1248
    %v1661 = vpack.c.b16 %v1253, %v1249
    %v1662 = vpack.c.b16 %v1254, %v1250
    %v1663 = vpack.c.b16 %v1259, %v1255
    %v1664 = vpack.c.b16 %v1260, %v1256
    %v1665 = vpack.c.b16 %v1261, %v1257
    %v1666 = vpack.c.b16 %v1262, %v1258
    %v1667 = vpack.c.b16 %v1267, %v1263
    %v1668 = vpack.c.b16 %v1268, %v1264
    %v1669 = vpack.c.b16 %v1269, %v1265
    %v1670 = vpack.c.b16 %v1270, %v1266
    %v1671 = vpack.c.b16 %v1275, %v1271
    %v1672 = vpack.c.b16 %v1276, %v1272
    %v1673 = vpack.c.b16 %v1277, %v1273
    %v1674 = vpack.c.b16 %v1278, %v1274
    %v1675 = vpack.c.b16 %v1283, %v1279
    %v1676 = vpack.c.b16 %v1284, %v1280
    %v1677 = vpack.c.b16 %v1285, %v1281
    %v1678 = vpack.c.b16 %v1286, %v1282
    %v1679 = vpack.c.b16 %v1291, %v1287
    %v1680 = vpack.c.b16 %v1292, %v1288
    %v1681 = vpack.c.b16 %v1293, %v1289
    %v1682 = vpack.c.b16 %v1294, %v1290
    %v1683 = vpack.c.b16 %v1299, %v1295
    %v1684 = vpack.c.b16 %v1300, %v1296
    %v1685 = vpack.c.b16 %v1301, %v1297
    %v1686 = vpack.c.b16 %v1302, %v1298
    %v1687 = vpack.c.b16 %v1307, %v1303
    %v1688 = vpack.c.b16 %v1308, %v1304
    %v1689 = vpack.c.b16 %v1309, %v1305
    %v1690 = vpack.c.b16 %v1310, %v1306
    %v1691 = vpack.c.b16 %v1315, %v1311
    %v1692 = vpack.c.b16 %v1316, %v1312
    %v1693 = vpack.c.b16 %v1317, %v1313
    %v1694 = vpack.c.b16 %v1318, %v1314
    %v1695 = vpack.c.b16 %v1323, %v1319
    %v1696 = vpack.c.b16 %v1324, %v1320
    %v1697 = vpack.c.b16 %v1325, %v1321
    %v1698 = vpack.c.b16 %v1326, %v1322
    %v1699 = vpack.c.b16 %v1331, %v1327
    %v1700 = vpack.c.b16 %v1332, %v1328
    %v1701 = vpack.c.b16 %v1333, %v1329
    %v1702 = vpack.c.b16 %v1334, %v1330
    %v1703 = vpack.c.b16 %v1339, %v1335
    %v1704 = vpack.c.b16 %v1340, %v1336
    %v1705 = vpack.c.b16 %v1341, %v1337
    %v1706 = vpack.c.b16 %v1342, %v1338
    %v1707 = vpack.c.b16 %v1347, %v1343
    %v1708 = vpack.c.b16 %v1348, %v1344
    %v1709 = vpack.c.b16 %v1349, %v1345
    %v1710 = vpack.c.b16 %v1350, %v1346
    %v1711 = vpack.c.b16 %v1355, %v1351
    %v1712 = vpack.c.b16 %v1356, %v1352
    %v1713 = vpack.c.b16 %v1357, %v1353
    %v1714 = vpack.c.b16 %v1358, %v1354
    %v1715 = vpack.c.b16 %v1363, %v1359
    %v1716 = vpack.c.b16 %v1364, %v1360
    %v1717 = vpack.c.b16 %v1365, %v1361
    %v1718 = vpack.c.b16 %v1366, %v1362
    %v1719 = vpack.c.b16 %v1371, %v1367
    %v1720 = vpack.c.b16 %v1372, %v1368
    %v1721 = vpack.c.b16 %v1373, %v1369
    %v1722 = vpack.c.b16 %v1374, %v1370
    %v1723 = vpack.c.b16 %v1379, %v1375
    %v1724 = vpack.c.b16 %v1380, %v1376
    %v1725 = vpack.c.b16 %v1381, %v1377
    %v1726 = vpack.c.b16 %v1382, %v1378
    %v1727 = vpack.c.b16 %v1387, %v1383
    %v1728 = vpack.c.b16 %v1388, %v1384
    %v1729 = vpack.c.b16 %v1389, %v1385
    %v1730 = vpack.c.b16 %v1390, %v1386
    %v1731 = vpack.c.b16 %v1395, %v1391
    %v1732 = vpack.c.b16 %v1396, %v1392
    %v1733 = vpack.c.b16 %v1397, %v1393
    %v1734 = vpack.c.b16 %v1398, %v1394
    %v1735 = vpack.c.b16 %v1403, %v1399
    %v1736 = vpack.c.b16 %v1404, %v1400
    %v1737 = vpack.c.b16 %v1405, %v1401
    %v1738 = vpack.c.b16 %v1406, %v1402
    %v1739 = vpack.c.b16 %v1411, %v1407
    %v1740 = vpack.c.b16 %v1412, %v1408
    %v1741 = vpack.c.b16 %v1413, %v1409
    %v1742 = vpack.c.b16 %v1414, %v1410
    %v1743 = vpack.c.b16 %v1419, %v1415
    %v1744 = vpack.c.b16 %v1420, %v1416
    %v1745 = vpack.c.b16 %v1421, %v1417
    %v1746 = vpack.c.b16 %v1422, %v1418
    %v1747 = vpack.c.b16 %v1427, %v1423
    %v1748 = vpack.c.b16 %v1428, %v1424
    %v1749 = vpack.c.b16 %v1429, %v1425
    %v1750 = vpack.c.b16 %v1430, %v1426
    %v1751 = vpack.c.b16 %v1435, %v1431
    %v1752 = vpack.c.b16 %v1436, %v1432
    %v1753 = vpack.c.b16 %v1437, %v1433
    %v1754 = vpack.c.b16 %v1438, %v1434
    %v1755 = vpack.c.b16 %v1443, %v1439
    %v1756 = vpack.c.b16 %v1444, %v1440
    %v1757 = vpack.c.b16 %v1445, %v1441
    %v1758 = vpack.c.b16 %v1446, %v1442
    %v1759 = vpack.c.b16 %v1451, %v1447
    %v1760 = vpack.c.b16 %v1452, %v1448
    %v1761 = vpack.c.b16 %v1453, %v1449
    %v1762 = vpack.c.b16 %v1454, %v1450
    %v1763 = vpack.c.b16 %v1459, %v1455
    %v1764 = vpack.c.b16 %v1460, %v1456
    %v1765 = vpack.c.b16 %v1461, %v1457
    %v1766 = vpack.c.b16 %v1462, %v1458
    %v1767 = vpack.c.b16 %v1467, %v1463
    %v1768 = vpack.c.b16 %v1468, %v1464
    %v1769 = vpack.c.b16 %v1469, %v1465
    %v1770 = vpack.c.b16 %v1470, %v1466
    %v1771 = vpack.c.b16 %v1475, %v1471
    %v1772 = vpack.c.b16 %v1476, %v1472
    %v1773 = vpack.c.b16 %v1477, %v1473
    %v1774 = vpack.c.b16 %v1478, %v1474
    %v1775 = vpack.c.b16 %v1483, %v1479
    %v1776 = vpack.c.b16 %v1484, %v1480
    %v1777 = vpack.c.b16 %v1485, %v1481
    %v1778 = vpack.c.b16 %v1486, %v1482
    %v1779 = vpack.c.b16 %v1491, %v1487
    %v1780 = vpack.c.b16 %v1492, %v1488
    %v1781 = vpack.c.b16 %v1493, %v1489
    %v1782 = vpack.c.b16 %v1494, %v1490
    %v1783 = vpack.c.b16 %v1499, %v1495
    %v1784 = vpack.c.b16 %v1500, %v1496
    %v1785 = vpack.c.b16 %v1501, %v1497
    %v1786 = vpack.c.b16 %v1502, %v1498
    %v1787 = vpack.c.b16 %v1507, %v1503
    %v1788 = vpack.c.b16 %v1508, %v1504
    %v1789 = vpack.c.b16 %v1509, %v1505
    %v1790 = vpack.c.b16 %v1510, %v1506
    %v1791 = vpack.c.b16 %v1515, %v1511
    %v1792 = vpack.c.b16 %v1516, %v1512
    %v1793 = vpack.c.b16 %v1517, %v1513
    %v1794 = vpack.c.b16 %v1518, %v1514
    %v1795 = vpack.c.b16 %v1523, %v1519
    %v1796 = vpack.c.b16 %v1524, %v1520
    %v1797 = vpack.c.b16 %v1525, %v1521
    %v1798 = vpack.c.b16 %v1526, %v1522
    %v1799 = vpack.c.b16 %v1531, %v1527
    %v1800 = vpack.c.b16 %v1532, %v1528
    %v1801 = vpack.c.b16 %v1533, %v1529
    %v1802 = vpack.c.b16 %v1534, %v1530
    %v1803 = vpack.c.b16 %v1539, %v1535
    %v1804 = vpack.c.b16 %v1540, %v1536
    %v1805 = vpack.c.b16 %v1541, %v1537
    %v1806 = vpack.c.b16 %v1542, %v1538
    %v1807 = vpack.c.b16 %v1547, %v1543
    %v1808 = vpack.c.b16 %v1548, %v1544
    %v1809 = vpack.c.b16 %v1549, %v1545
    %v1810 = vpack.c.b16 %v1550, %v1546
    %v1811 = vpack.c.b16 %v1555, %v1551
    %v1812 = vpack.c.b16 %v1556, %v1552
    %v1813 = vpack.c.b16 %v1557, %v1553
    %v1814 = vpack.c.b16 %v1558, %v1554
    %2071 = vmatprep.subr.bf16.mxu0 %v1588
    %2072 = vmatpush1.bf16.msra.mxu0 %v1587
    %2073 = vmatprep.subr.bf16.mxu0 %v1584
    %2074 = vmatpush1.bf16.msra.mxu0 %v1583
    %2075 = vmatprep.subr.bf16.mxu0 %v1580
    %2076 = vmatpush1.bf16.msra.mxu0 %v1579
    %2077 = vmatprep.subr.bf16.mxu0 %v1576
    %2078 = vmatpush1.bf16.msra.mxu0 %v1575
    %2079 = vmatprep.subr.bf16.mxu0 %v1572
    %2080 = vmatpush1.bf16.msra.mxu0 %v1571
    %2081 = vmatprep.subr.bf16.mxu0 %v1568
    %2082 = vmatpush1.bf16.msra.mxu0 %v1567
    %2083 = vmatprep.subr.bf16.mxu0 %v1564
    %2084 = vmatpush1.bf16.msra.mxu0 %v1563
    %2085 = vmatprep.subr.bf16.mxu0 %v1560
    %2086 = vmatpush1.bf16.msra.mxu0 %v1559
    %2087 = vmatprep.subr.bf16.mxu0 %v1620
    %2088 = vmatpush2.bf16.msra.mxu0 %v1619
    %2089 = vmatprep.subr.bf16.mxu0 %v1616
    %2090 = vmatpush2.bf16.msra.mxu0 %v1615
    %2091 = vmatprep.subr.bf16.mxu0 %v1612
    %2092 = vmatpush2.bf16.msra.mxu0 %v1611
    %2093 = vmatprep.subr.bf16.mxu0 %v1608
    %2094 = vmatpush2.bf16.msra.mxu0 %v1607
    %2095 = vmatprep.subr.bf16.mxu0 %v1604
    %2096 = vmatpush2.bf16.msra.mxu0 %v1603
    %2097 = vmatprep.subr.bf16.mxu0 %v1600
    %2098 = vmatpush2.bf16.msra.mxu0 %v1599
    %2099 = vmatprep.subr.bf16.mxu0 %v1596
    %2100 = vmatpush2.bf16.msra.mxu0 %v1595
    %2101 = vmatprep.subr.bf16.mxu0 %v1592
    %2102 = vmatpush2.bf16.msra.mxu0 %v1591
    %2103 = vmatprep.mubr.bf16.mxu0 %v482
    %2104 = vmatmul.mubr.bf16.gmra.mxu0 %v479
    %v2105 = vpop.f32.mrf.mxu0
    %v2106 = vadd.f32 0.0, %v2105
    %v2107 = vpop.f32.mrf.mxu0
    %v2108 = vadd.f32 0.0, %v2107
    %v2109 = vpop.f32.mrf.mxu0
    %v2110 = vadd.f32 0.0, %v2109
    %v2111 = vpop.f32.mrf.mxu0
    %v2112 = vadd.f32 0.0, %v2111
    %2113 = vdwg.mxu0
    %2114 = vmatprep.subr.bf16.mxu0 %v1652
    %2115 = vmatpush1.bf16.msra.mxu0 %v1651
    %2116 = vmatprep.subr.bf16.mxu0 %v1648
    %2117 = vmatpush1.bf16.msra.mxu0 %v1647
    %2118 = vmatprep.subr.bf16.mxu0 %v1644
    %2119 = vmatpush1.bf16.msra.mxu0 %v1643
    %2120 = vmatprep.subr.bf16.mxu0 %v1640
    %2121 = vmatpush1.bf16.msra.mxu0 %v1639
    %2122 = vmatprep.subr.bf16.mxu0 %v1636
    %2123 = vmatpush1.bf16.msra.mxu0 %v1635
    %2124 = vmatprep.subr.bf16.mxu0 %v1632
    %2125 = vmatpush1.bf16.msra.mxu0 %v1631
    %2126 = vmatprep.subr.bf16.mxu0 %v1628
    %2127 = vmatpush1.bf16.msra.mxu0 %v1627
    %2128 = vmatprep.subr.bf16.mxu0 %v1624
    %2129 = vmatpush1.bf16.msra.mxu0 %v1623
    %2130 = vmatprep.subr.bf16.mxu0 %v1684
    %2131 = vmatpush2.bf16.msra.mxu0 %v1683
    %2132 = vmatprep.subr.bf16.mxu0 %v1680
    %2133 = vmatpush2.bf16.msra.mxu0 %v1679
    %2134 = vmatprep.subr.bf16.mxu0 %v1676
    %2135 = vmatpush2.bf16.msra.mxu0 %v1675
    %2136 = vmatprep.subr.bf16.mxu0 %v1672
    %2137 = vmatpush2.bf16.msra.mxu0 %v1671
    %2138 = vmatprep.subr.bf16.mxu0 %v1668
    %2139 = vmatpush2.bf16.msra.mxu0 %v1667
    %2140 = vmatprep.subr.bf16.mxu0 %v1664
    %2141 = vmatpush2.bf16.msra.mxu0 %v1663
    %2142 = vmatprep.subr.bf16.mxu0 %v1660
    %2143 = vmatpush2.bf16.msra.mxu0 %v1659
    %2144 = vmatprep.subr.bf16.mxu0 %v1656
    %2145 = vmatpush2.bf16.msra.mxu0 %v1655
    %2146 = vmatprep.mubr.bf16.mxu0 %v488
    %2147 = vmatmul.mubr.bf16.gmra.mxu0 %v485
    %v2148 = vpop.f32.mrf.mxu0
    %v2149 = vadd.f32 %v2106, %v2148
    %v2150 = vpop.f32.mrf.mxu0
    %v2151 = vadd.f32 %v2108, %v2150
    %v2152 = vpop.f32.mrf.mxu0
    %v2153 = vadd.f32 %v2110, %v2152
    %v2154 = vpop.f32.mrf.mxu0
    %v2155 = vadd.f32 %v2112, %v2154
    %2156 = vdwg.mxu0
    %2157 = vmatprep.subr.bf16.mxu0 %v1716
    %2158 = vmatpush1.bf16.msra.mxu0 %v1715
    %2159 = vmatprep.subr.bf16.mxu0 %v1712
    %2160 = vmatpush1.bf16.msra.mxu0 %v1711
    %2161 = vmatprep.subr.bf16.mxu0 %v1708
    %2162 = vmatpush1.bf16.msra.mxu0 %v1707
    %2163 = vmatprep.subr.bf16.mxu0 %v1704
    %2164 = vmatpush1.bf16.msra.mxu0 %v1703
    %2165 = vmatprep.subr.bf16.mxu0 %v1700
    %2166 = vmatpush1.bf16.msra.mxu0 %v1699
    %2167 = vmatprep.subr.bf16.mxu0 %v1696
    %2168 = vmatpush1.bf16.msra.mxu0 %v1695
    %2169 = vmatprep.subr.bf16.mxu0 %v1692
    %2170 = vmatpush1.bf16.msra.mxu0 %v1691
    %2171 = vmatprep.subr.bf16.mxu0 %v1688
    %2172 = vmatpush1.bf16.msra.mxu0 %v1687
    %2173 = vmatprep.subr.bf16.mxu0 %v1748
    %2174 = vmatpush2.bf16.msra.mxu0 %v1747
    %2175 = vmatprep.subr.bf16.mxu0 %v1744
    %2176 = vmatpush2.bf16.msra.mxu0 %v1743
    %2177 = vmatprep.subr.bf16.mxu0 %v1740
    %2178 = vmatpush2.bf16.msra.mxu0 %v1739
    %2179 = vmatprep.subr.bf16.mxu0 %v1736
    %2180 = vmatpush2.bf16.msra.mxu0 %v1735
    %2181 = vmatprep.subr.bf16.mxu0 %v1732
    %2182 = vmatpush2.bf16.msra.mxu0 %v1731
    %2183 = vmatprep.subr.bf16.mxu0 %v1728
    %2184 = vmatpush2.bf16.msra.mxu0 %v1727
    %2185 = vmatprep.subr.bf16.mxu0 %v1724
    %2186 = vmatpush2.bf16.msra.mxu0 %v1723
    %2187 = vmatprep.subr.bf16.mxu0 %v1720
    %2188 = vmatpush2.bf16.msra.mxu0 %v1719
    %2189 = vmatprep.mubr.bf16.mxu0 %v494
    %2190 = vmatmul.mubr.bf16.gmra.mxu0 %v491
    %v2191 = vpop.f32.mrf.mxu0
    %v2192 = vadd.f32 %v2149, %v2191
    %v2193 = vpop.f32.mrf.mxu0
    %v2194 = vadd.f32 %v2151, %v2193
    %v2195 = vpop.f32.mrf.mxu0
    %v2196 = vadd.f32 %v2153, %v2195
    %v2197 = vpop.f32.mrf.mxu0
    %v2198 = vadd.f32 %v2155, %v2197
    %2199 = vdwg.mxu0
    %2200 = vmatprep.subr.bf16.mxu0 %v1780
    %2201 = vmatpush1.bf16.msra.mxu0 %v1779
    %2202 = vmatprep.subr.bf16.mxu0 %v1776
    %2203 = vmatpush1.bf16.msra.mxu0 %v1775
    %2204 = vmatprep.subr.bf16.mxu0 %v1772
    %2205 = vmatpush1.bf16.msra.mxu0 %v1771
    %2206 = vmatprep.subr.bf16.mxu0 %v1768
    %2207 = vmatpush1.bf16.msra.mxu0 %v1767
    %2208 = vmatprep.subr.bf16.mxu0 %v1764
    %2209 = vmatpush1.bf16.msra.mxu0 %v1763
    %2210 = vmatprep.subr.bf16.mxu0 %v1760
    %2211 = vmatpush1.bf16.msra.mxu0 %v1759
    %2212 = vmatprep.subr.bf16.mxu0 %v1756
    %2213 = vmatpush1.bf16.msra.mxu0 %v1755
    %2214 = vmatprep.subr.bf16.mxu0 %v1752
    %2215 = vmatpush1.bf16.msra.mxu0 %v1751
    %2216 = vmatprep.subr.bf16.mxu0 %v1812
    %2217 = vmatpush2.bf16.msra.mxu0 %v1811
    %2218 = vmatprep.subr.bf16.mxu0 %v1808
    %2219 = vmatpush2.bf16.msra.mxu0 %v1807
    %2220 = vmatprep.subr.bf16.mxu0 %v1804
    %2221 = vmatpush2.bf16.msra.mxu0 %v1803
    %2222 = vmatprep.subr.bf16.mxu0 %v1800
    %2223 = vmatpush2.bf16.msra.mxu0 %v1799
    %2224 = vmatprep.subr.bf16.mxu0 %v1796
    %2225 = vmatpush2.bf16.msra.mxu0 %v1795
    %2226 = vmatprep.subr.bf16.mxu0 %v1792
    %2227 = vmatpush2.bf16.msra.mxu0 %v1791
    %2228 = vmatprep.subr.bf16.mxu0 %v1788
    %2229 = vmatpush2.bf16.msra.mxu0 %v1787
    %2230 = vmatprep.subr.bf16.mxu0 %v1784
    %2231 = vmatpush2.bf16.msra.mxu0 %v1783
    %2232 = vmatprep.mubr.bf16.mxu0 %v500
    %2233 = vmatmul.mubr.bf16.gmra.mxu0 %v497
    %v2234 = vpop.f32.mrf.mxu0
    %v2235 = vadd.f32 %v2192, %v2234
    %v2236 = vpop.f32.mrf.mxu0
    %v2237 = vadd.f32 %v2194, %v2236
    %v2238 = vpop.f32.mrf.mxu0
    %v2239 = vadd.f32 %v2196, %v2238
    %v2240 = vpop.f32.mrf.mxu0
    %v2241 = vadd.f32 %v2198, %v2240
    %2242 = vdwg.mxu0
    %2243 = vmatprep.subr.bf16.mxu0 %v1590
    %2244 = vmatpush1.bf16.msra.mxu0 %v1589
    %2245 = vmatprep.subr.bf16.mxu0 %v1586
    %2246 = vmatpush1.bf16.msra.mxu0 %v1585
    %2247 = vmatprep.subr.bf16.mxu0 %v1582
    %2248 = vmatpush1.bf16.msra.mxu0 %v1581
    %2249 = vmatprep.subr.bf16.mxu0 %v1578
    %2250 = vmatpush1.bf16.msra.mxu0 %v1577
    %2251 = vmatprep.subr.bf16.mxu0 %v1574
    %2252 = vmatpush1.bf16.msra.mxu0 %v1573
    %2253 = vmatprep.subr.bf16.mxu0 %v1570
    %2254 = vmatpush1.bf16.msra.mxu0 %v1569
    %2255 = vmatprep.subr.bf16.mxu0 %v1566
    %2256 = vmatpush1.bf16.msra.mxu0 %v1565
    %2257 = vmatprep.subr.bf16.mxu0 %v1562
    %2258 = vmatpush1.bf16.msra.mxu0 %v1561
    %2259 = vmatprep.subr.bf16.mxu0 %v1622
    %2260 = vmatpush2.bf16.msra.mxu0 %v1621
    %2261 = vmatprep.subr.bf16.mxu0 %v1618
    %2262 = vmatpush2.bf16.msra.mxu0 %v1617
    %2263 = vmatprep.subr.bf16.mxu0 %v1614
    %2264 = vmatpush2.bf16.msra.mxu0 %v1613
    %2265 = vmatprep.subr.bf16.mxu0 %v1610
    %2266 = vmatpush2.bf16.msra.mxu0 %v1609
    %2267 = vmatprep.subr.bf16.mxu0 %v1606
    %2268 = vmatpush2.bf16.msra.mxu0 %v1605
    %2269 = vmatprep.subr.bf16.mxu0 %v1602
    %2270 = vmatpush2.bf16.msra.mxu0 %v1601
    %2271 = vmatprep.subr.bf16.mxu0 %v1598
    %2272 = vmatpush2.bf16.msra.mxu0 %v1597
    %2273 = vmatprep.subr.bf16.mxu0 %v1594
    %2274 = vmatpush2.bf16.msra.mxu0 %v1593
    %2275 = vmatprep.mubr.bf16.mxu0 %v482
    %2276 = vmatmul.mubr.bf16.gmra.mxu0 %v479
    %v2277 = vpop.f32.mrf.mxu0
    %v2278 = vadd.f32 0.0, %v2277
    %v2279 = vpop.f32.mrf.mxu0
    %v2280 = vadd.f32 0.0, %v2279
    %v2281 = vpop.f32.mrf.mxu0
    %v2282 = vadd.f32 0.0, %v2281
    %v2283 = vpop.f32.mrf.mxu0
    %v2284 = vadd.f32 0.0, %v2283
    %2285 = vdwg.mxu0
    %2286 = vmatprep.subr.bf16.mxu0 %v1654
    %2287 = vmatpush1.bf16.msra.mxu0 %v1653
    %2288 = vmatprep.subr.bf16.mxu0 %v1650
    %2289 = vmatpush1.bf16.msra.mxu0 %v1649
    %2290 = vmatprep.subr.bf16.mxu0 %v1646
    %2291 = vmatpush1.bf16.msra.mxu0 %v1645
    %2292 = vmatprep.subr.bf16.mxu0 %v1642
    %2293 = vmatpush1.bf16.msra.mxu0 %v1641
    %2294 = vmatprep.subr.bf16.mxu0 %v1638
    %2295 = vmatpush1.bf16.msra.mxu0 %v1637
    %2296 = vmatprep.subr.bf16.mxu0 %v1634
    %2297 = vmatpush1.bf16.msra.mxu0 %v1633
    %2298 = vmatprep.subr.bf16.mxu0 %v1630
    %2299 = vmatpush1.bf16.msra.mxu0 %v1629
    %2300 = vmatprep.subr.bf16.mxu0 %v1626
    %2301 = vmatpush1.bf16.msra.mxu0 %v1625
    %2302 = vmatprep.subr.bf16.mxu0 %v1686
    %2303 = vmatpush2.bf16.msra.mxu0 %v1685
    %2304 = vmatprep.subr.bf16.mxu0 %v1682
    %2305 = vmatpush2.bf16.msra.mxu0 %v1681
    %2306 = vmatprep.subr.bf16.mxu0 %v1678
    %2307 = vmatpush2.bf16.msra.mxu0 %v1677
    %2308 = vmatprep.subr.bf16.mxu0 %v1674
    %2309 = vmatpush2.bf16.msra.mxu0 %v1673
    %2310 = vmatprep.subr.bf16.mxu0 %v1670
    %2311 = vmatpush2.bf16.msra.mxu0 %v1669
    %2312 = vmatprep.subr.bf16.mxu0 %v1666
    %2313 = vmatpush2.bf16.msra.mxu0 %v1665
    %2314 = vmatprep.subr.bf16.mxu0 %v1662
    %2315 = vmatpush2.bf16.msra.mxu0 %v1661
    %2316 = vmatprep.subr.bf16.mxu0 %v1658
    %2317 = vmatpush2.bf16.msra.mxu0 %v1657
    %2318 = vmatprep.mubr.bf16.mxu0 %v488
    %2319 = vmatmul.mubr.bf16.gmra.mxu0 %v485
    %v2320 = vpop.f32.mrf.mxu0
    %v2321 = vadd.f32 %v2278, %v2320
    %v2322 = vpop.f32.mrf.mxu0
    %v2323 = vadd.f32 %v2280, %v2322
    %v2324 = vpop.f32.mrf.mxu0
    %v2325 = vadd.f32 %v2282, %v2324
    %v2326 = vpop.f32.mrf.mxu0
    %v2327 = vadd.f32 %v2284, %v2326
    %2328 = vdwg.mxu0
    %2329 = vmatprep.subr.bf16.mxu0 %v1718
    %2330 = vmatpush1.bf16.msra.mxu0 %v1717
    %2331 = vmatprep.subr.bf16.mxu0 %v1714
    %2332 = vmatpush1.bf16.msra.mxu0 %v1713
    %2333 = vmatprep.subr.bf16.mxu0 %v1710
    %2334 = vmatpush1.bf16.msra.mxu0 %v1709
    %2335 = vmatprep.subr.bf16.mxu0 %v1706
    %2336 = vmatpush1.bf16.msra.mxu0 %v1705
    %2337 = vmatprep.subr.bf16.mxu0 %v1702
    %2338 = vmatpush1.bf16.msra.mxu0 %v1701
    %2339 = vmatprep.subr.bf16.mxu0 %v1698
    %2340 = vmatpush1.bf16.msra.mxu0 %v1697
    %2341 = vmatprep.subr.bf16.mxu0 %v1694
    %2342 = vmatpush1.bf16.msra.mxu0 %v1693
    %2343 = vmatprep.subr.bf16.mxu0 %v1690
    %2344 = vmatpush1.bf16.msra.mxu0 %v1689
    %2345 = vmatprep.subr.bf16.mxu0 %v1750
    %2346 = vmatpush2.bf16.msra.mxu0 %v1749
    %2347 = vmatprep.subr.bf16.mxu0 %v1746
    %2348 = vmatpush2.bf16.msra.mxu0 %v1745
    %2349 = vmatprep.subr.bf16.mxu0 %v1742
    %2350 = vmatpush2.bf16.msra.mxu0 %v1741
    %2351 = vmatprep.subr.bf16.mxu0 %v1738
    %2352 = vmatpush2.bf16.msra.mxu0 %v1737
    %2353 = vmatprep.subr.bf16.mxu0 %v1734
    %2354 = vmatpush2.bf16.msra.mxu0 %v1733
    %2355 = vmatprep.subr.bf16.mxu0 %v1730
    %2356 = vmatpush2.bf16.msra.mxu0 %v1729
    %2357 = vmatprep.subr.bf16.mxu0 %v1726
    %2358 = vmatpush2.bf16.msra.mxu0 %v1725
    %2359 = vmatprep.subr.bf16.mxu0 %v1722
    %2360 = vmatpush2.bf16.msra.mxu0 %v1721
    %2361 = vmatprep.mubr.bf16.mxu0 %v494
    %2362 = vmatmul.mubr.bf16.gmra.mxu0 %v491
    %v2363 = vpop.f32.mrf.mxu0
    %v2364 = vadd.f32 %v2321, %v2363
    %v2365 = vpop.f32.mrf.mxu0
    %v2366 = vadd.f32 %v2323, %v2365
    %v2367 = vpop.f32.mrf.mxu0
    %v2368 = vadd.f32 %v2325, %v2367
    %v2369 = vpop.f32.mrf.mxu0
    %v2370 = vadd.f32 %v2327, %v2369
    %2371 = vdwg.mxu0
    %2372 = vmatprep.subr.bf16.mxu0 %v1782
    %2373 = vmatpush1.bf16.msra.mxu0 %v1781
    %2374 = vmatprep.subr.bf16.mxu0 %v1778
    %2375 = vmatpush1.bf16.msra.mxu0 %v1777
    %2376 = vmatprep.subr.bf16.mxu0 %v1774
    %2377 = vmatpush1.bf16.msra.mxu0 %v1773
    %2378 = vmatprep.subr.bf16.mxu0 %v1770
    %2379 = vmatpush1.bf16.msra.mxu0 %v1769
    %2380 = vmatprep.subr.bf16.mxu0 %v1766
    %2381 = vmatpush1.bf16.msra.mxu0 %v1765
    %2382 = vmatprep.subr.bf16.mxu0 %v1762
    %2383 = vmatpush1.bf16.msra.mxu0 %v1761
    %2384 = vmatprep.subr.bf16.mxu0 %v1758
    %2385 = vmatpush1.bf16.msra.mxu0 %v1757
    %2386 = vmatprep.subr.bf16.mxu0 %v1754
    %2387 = vmatpush1.bf16.msra.mxu0 %v1753
    %2388 = vmatprep.subr.bf16.mxu0 %v1814
    %2389 = vmatpush2.bf16.msra.mxu0 %v1813
    %2390 = vmatprep.subr.bf16.mxu0 %v1810
    %2391 = vmatpush2.bf16.msra.mxu0 %v1809
    %2392 = vmatprep.subr.bf16.mxu0 %v1806
    %2393 = vmatpush2.bf16.msra.mxu0 %v1805
    %2394 = vmatprep.subr.bf16.mxu0 %v1802
    %2395 = vmatpush2.bf16.msra.mxu0 %v1801
    %2396 = vmatprep.subr.bf16.mxu0 %v1798
    %2397 = vmatpush2.bf16.msra.mxu0 %v1797
    %2398 = vmatprep.subr.bf16.mxu0 %v1794
    %2399 = vmatpush2.bf16.msra.mxu0 %v1793
    %2400 = vmatprep.subr.bf16.mxu0 %v1790
    %2401 = vmatpush2.bf16.msra.mxu0 %v1789
    %2402 = vmatprep.subr.bf16.mxu0 %v1786
    %2403 = vmatpush2.bf16.msra.mxu0 %v1785
    %2404 = vmatprep.mubr.bf16.mxu0 %v500
    %2405 = vmatmul.mubr.bf16.gmra.mxu0 %v497
    %v2406 = vpop.f32.mrf.mxu0
    %v2407 = vadd.f32 %v2364, %v2406
    %v2408 = vpop.f32.mrf.mxu0
    %v2409 = vadd.f32 %v2366, %v2408
    %v2410 = vpop.f32.mrf.mxu0
    %v2411 = vadd.f32 %v2368, %v2410
    %v2412 = vpop.f32.mrf.mxu0
    %v2413 = vadd.f32 %v2370, %v2412
    %2414 = vdwg.mxu0
    %v2415 = vrcp.pop %v525
    %v2416 = vrcp.pop %v534
    %v2417 = vmul.f32 %v2235, %v2415
    %v2418 = vmul.f32 %v2237, %v2415
    %v2419 = vmul.f32 %v2407, %v2415
    %v2420 = vmul.f32 %v2409, %v2415
    %v2421 = vmul.f32 %v2239, %v2416
    %v2422 = vmul.f32 %v2241, %v2416
    %v2423 = vmul.f32 %v2411, %v2416
    %v2424 = vmul.f32 %v2413, %v2416
    %v2425 = vld [vmem:[%s4] sm:$0xf]
    %v2427 = vlaneseq
    %v2428 = vshrl.u32 %v2427, 7
    %v2429 = vsub.s32 0, %v2428
    %v2430 = vrot.slane %v2425, %v2429
    %v2431 = vlaneseq
    %v2432 = vshrl.u32 %v2431, 7
    %v2433 = vsub.s32 1, %v2432
    %v2434 = vrot.slane %v2425, %v2433
    %v2435 = vlaneseq
    %v2436 = vshrl.u32 %v2435, 7
    %v2437 = vsub.s32 2, %v2436
    %v2438 = vrot.slane %v2425, %v2437
    %v2439 = vlaneseq
    %v2440 = vshrl.u32 %v2439, 7
    %v2441 = vsub.s32 3, %v2440
    %v2442 = vrot.slane %v2425, %v2441
    %v2447 = vadd.f32 %v2417, %v2430
    %v2448 = vadd.f32 %v2418, %v2434
    %v2449 = vadd.f32 %v2419, %v2438
    %v2450 = vadd.f32 %v2420, %v2442
    %v2451 = vadd.f32 %v2421, %v2430
    %v2452 = vadd.f32 %v2422, %v2434
    %v2453 = vadd.f32 %v2423, %v2438
    %v2454 = vadd.f32 %v2424, %v2442
    %v2455 = vmax.f32 %v2447, %v2449
    %v2456 = vmax.f32 %v2448, %v2450
    %v2457 = vmax.f32 %v2455, %v2456
    %2458 = vmax.xlane.f32.xlu0 %v2457
    %v2459 = vpop.xlane.xlu0 %2458
    %v2460 = vmax.f32 %v2451, %v2453
    %v2461 = vmax.f32 %v2452, %v2454
    %v2462 = vmax.f32 %v2460, %v2461
    %2463 = vmax.xlane.f32.xlu0 %v2462
    %v2464 = vpop.xlane.xlu0 %2463
    %v2465 = vsub.f32 %v2447, %v2459
    %v2466 = vsub.f32 %v2448, %v2459
    %v2467 = vsub.f32 %v2449, %v2459
    %v2468 = vsub.f32 %v2450, %v2459
    %v2469 = vsub.f32 %v2451, %v2464
    %v2470 = vsub.f32 %v2452, %v2464
    %v2471 = vsub.f32 %v2453, %v2464
    %v2472 = vsub.f32 %v2454, %v2464
    %v2473 = vpack.c.bf16 %v2469, %v2465
    %v2474 = vpack.c.bf16 %v2470, %v2466
    %v2475 = vpack.c.bf16 %v2471, %v2467
    %v2476 = vpack.c.bf16 %v2472, %v2468
    %v2478 = vmul.bf16 %v2473, 1069105081
    %v2479 = vpow.bf16.pop %v2478
    %v2481 = vmul.bf16 %v2474, 1069105081
    %v2482 = vpow.bf16.pop %v2481
    %v2484 = vmul.bf16 %v2475, 1069105081
    %v2485 = vpow.bf16.pop %v2484
    %v2487 = vmul.bf16 %v2476, 1069105081
    %v2488 = vpow.bf16.pop %v2487
    %v2489 = vunpack.c.l.bf16 %v2479
    %v2490 = vunpack.c.l.bf16 %v2482
    %v2491 = vunpack.c.l.bf16 %v2485
    %v2492 = vunpack.c.l.bf16 %v2488
    %v2493 = vunpack.c.h.bf16 %v2479
    %v2494 = vunpack.c.h.bf16 %v2482
    %v2495 = vunpack.c.h.bf16 %v2485
    %v2496 = vunpack.c.h.bf16 %v2488
    %v2497 = vadd.f32 %v2489, %v2490
    %v2498 = vadd.f32 %v2497, %v2491
    %v2499 = vadd.f32 %v2498, %v2492
    %2500 = vadd.xlane.f32.xlu0 %v2499
    %v2501 = vpop.xlane.xlu0 %2500
    %v2502 = vadd.f32 %v2493, %v2494
    %v2503 = vadd.f32 %v2502, %v2495
    %v2504 = vadd.f32 %v2503, %v2496
    %2505 = vadd.xlane.f32.xlu0 %v2504
    %v2506 = vpop.xlane.xlu0 %2505
    %v2507 = vld [vmem:[#allocation10] sm:$0xff]
    %v2508 = vld [vmem:[#allocation10 + $0x8] sm:$0xff]
    %v2509 = vld [vmem:[#allocation10 + $0x10] sm:$0xff]
    %v2510 = vld [vmem:[#allocation10 + $0x18] sm:$0xff]
    %v2511 = vld [vmem:[#allocation10 + $0x20] sm:$0xff]
    %v2512 = vld [vmem:[#allocation10 + $0x28] sm:$0xff]
    %v2513 = vld [vmem:[#allocation10 + $0x30] sm:$0xff]
    %v2514 = vld [vmem:[#allocation10 + $0x38] sm:$0xff]
    %v2515 = vld [vmem:[#allocation10 + $0x40] sm:$0xff]
    %v2516 = vld [vmem:[#allocation10 + $0x48] sm:$0xff]
    %v2517 = vld [vmem:[#allocation10 + $0x50] sm:$0xff]
    %v2518 = vld [vmem:[#allocation10 + $0x58] sm:$0xff]
    %v2519 = vld [vmem:[#allocation10 + $0x60] sm:$0xff]
    %v2520 = vld [vmem:[#allocation10 + $0x68] sm:$0xff]
    %v2521 = vld [vmem:[#allocation10 + $0x70] sm:$0xff]
    %v2522 = vld [vmem:[#allocation10 + $0x78] sm:$0xff]
    %v2523 = vld [vmem:[#allocation10 + $0x80] sm:$0xff]
    %v2524 = vld [vmem:[#allocation10 + $0x88] sm:$0xff]
    %v2525 = vld [vmem:[#allocation10 + $0x90] sm:$0xff]
    %v2526 = vld [vmem:[#allocation10 + $0x98] sm:$0xff]
    %v2527 = vld [vmem:[#allocation10 + $0xa0] sm:$0xff]
    %v2528 = vld [vmem:[#allocation10 + $0xa8] sm:$0xff]
    %v2529 = vld [vmem:[#allocation10 + $0xb0] sm:$0xff]
    %v2530 = vld [vmem:[#allocation10 + $0xb8] sm:$0xff]
    %v2531 = vld [vmem:[#allocation10 + $0xc0] sm:$0xff]
    %v2532 = vld [vmem:[#allocation10 + $0xc8] sm:$0xff]
    %v2533 = vld [vmem:[#allocation10 + $0xd0] sm:$0xff]
    %v2534 = vld [vmem:[#allocation10 + $0xd8] sm:$0xff]
    %v2535 = vld [vmem:[#allocation10 + $0xe0] sm:$0xff]
    %v2536 = vld [vmem:[#allocation10 + $0xe8] sm:$0xff]
    %v2537 = vld [vmem:[#allocation10 + $0xf0] sm:$0xff]
    %v2538 = vld [vmem:[#allocation10 + $0xf8] sm:$0xff]
    %v2539 = vld [vmem:[#allocation10 + $0x100] sm:$0xff]
    %v2540 = vld [vmem:[#allocation10 + $0x108] sm:$0xff]
    %v2541 = vld [vmem:[#allocation10 + $0x110] sm:$0xff]
    %v2542 = vld [vmem:[#allocation10 + $0x118] sm:$0xff]
    %v2543 = vld [vmem:[#allocation10 + $0x120] sm:$0xff]
    %v2544 = vld [vmem:[#allocation10 + $0x128] sm:$0xff]
    %v2545 = vld [vmem:[#allocation10 + $0x130] sm:$0xff]
    %v2546 = vld [vmem:[#allocation10 + $0x138] sm:$0xff]
    %v2547 = vld [vmem:[#allocation10 + $0x140] sm:$0xff]
    %v2548 = vld [vmem:[#allocation10 + $0x148] sm:$0xff]
    %v2549 = vld [vmem:[#allocation10 + $0x150] sm:$0xff]
    %v2550 = vld [vmem:[#allocation10 + $0x158] sm:$0xff]
    %v2551 = vld [vmem:[#allocation10 + $0x160] sm:$0xff]
    %v2552 = vld [vmem:[#allocation10 + $0x168] sm:$0xff]
    %v2553 = vld [vmem:[#allocation10 + $0x170] sm:$0xff]
    %v2554 = vld [vmem:[#allocation10 + $0x178] sm:$0xff]
    %v2555 = vld [vmem:[#allocation10 + $0x180] sm:$0xff]
    %v2556 = vld [vmem:[#allocation10 + $0x188] sm:$0xff]
    %v2557 = vld [vmem:[#allocation10 + $0x190] sm:$0xff]
    %v2558 = vld [vmem:[#allocation10 + $0x198] sm:$0xff]
    %v2559 = vld [vmem:[#allocation10 + $0x1a0] sm:$0xff]
    %v2560 = vld [vmem:[#allocation10 + $0x1a8] sm:$0xff]
    %v2561 = vld [vmem:[#allocation10 + $0x1b0] sm:$0xff]
    %v2562 = vld [vmem:[#allocation10 + $0x1b8] sm:$0xff]
    %v2563 = vld [vmem:[#allocation10 + $0x1c0] sm:$0xff]
    %v2564 = vld [vmem:[#allocation10 + $0x1c8] sm:$0xff]
    %v2565 = vld [vmem:[#allocation10 + $0x1d0] sm:$0xff]
    %v2566 = vld [vmem:[#allocation10 + $0x1d8] sm:$0xff]
    %v2567 = vld [vmem:[#allocation10 + $0x1e0] sm:$0xff]
    %v2568 = vld [vmem:[#allocation10 + $0x1e8] sm:$0xff]
    %v2569 = vld [vmem:[#allocation10 + $0x1f0] sm:$0xff]
    %v2570 = vld [vmem:[#allocation10 + $0x1f8] sm:$0xff]
    %v2635 = vunpack.c.l.b16 %v2507
    %v2636 = vunpack.c.h.b16 %v2507
    %v2637 = vunpack.c.l.b16 %v2508
    %v2638 = vunpack.c.h.b16 %v2508
    %v2639 = vunpack.c.l.b16 %v2509
    %v2640 = vunpack.c.h.b16 %v2509
    %v2641 = vunpack.c.l.b16 %v2510
    %v2642 = vunpack.c.h.b16 %v2510
    %v2643 = vunpack.c.l.b16 %v2511
    %v2644 = vunpack.c.h.b16 %v2511
    %v2645 = vunpack.c.l.b16 %v2512
    %v2646 = vunpack.c.h.b16 %v2512
    %v2647 = vunpack.c.l.b16 %v2513
    %v2648 = vunpack.c.h.b16 %v2513
    %v2649 = vunpack.c.l.b16 %v2514
    %v2650 = vunpack.c.h.b16 %v2514
    %v2651 = vunpack.c.l.b16 %v2515
    %v2652 = vunpack.c.h.b16 %v2515
    %v2653 = vunpack.c.l.b16 %v2516
    %v2654 = vunpack.c.h.b16 %v2516
    %v2655 = vunpack.c.l.b16 %v2517
    %v2656 = vunpack.c.h.b16 %v2517
    %v2657 = vunpack.c.l.b16 %v2518
    %v2658 = vunpack.c.h.b16 %v2518
    %v2659 = vunpack.c.l.b16 %v2519
    %v2660 = vunpack.c.h.b16 %v2519
    %v2661 = vunpack.c.l.b16 %v2520
    %v2662 = vunpack.c.h.b16 %v2520
    %v2663 = vunpack.c.l.b16 %v2521
    %v2664 = vunpack.c.h.b16 %v2521
    %v2665 = vunpack.c.l.b16 %v2522
    %v2666 = vunpack.c.h.b16 %v2522
    %v2667 = vunpack.c.l.b16 %v2523
    %v2668 = vunpack.c.h.b16 %v2523
    %v2669 = vunpack.c.l.b16 %v2524
    %v2670 = vunpack.c.h.b16 %v2524
    %v2671 = vunpack.c.l.b16 %v2525
    %v2672 = vunpack.c.h.b16 %v2525
    %v2673 = vunpack.c.l.b16 %v2526
    %v2674 = vunpack.c.h.b16 %v2526
    %v2675 = vunpack.c.l.b16 %v2527
    %v2676 = vunpack.c.h.b16 %v2527
    %v2677 = vunpack.c.l.b16 %v2528
    %v2678 = vunpack.c.h.b16 %v2528
    %v2679 = vunpack.c.l.b16 %v2529
    %v2680 = vunpack.c.h.b16 %v2529
    %v2681 = vunpack.c.l.b16 %v2530
    %v2682 = vunpack.c.h.b16 %v2530
    %v2683 = vunpack.c.l.b16 %v2531
    %v2684 = vunpack.c.h.b16 %v2531
    %v2685 = vunpack.c.l.b16 %v2532
    %v2686 = vunpack.c.h.b16 %v2532
    %v2687 = vunpack.c.l.b16 %v2533
    %v2688 = vunpack.c.h.b16 %v2533
    %v2689 = vunpack.c.l.b16 %v2534
    %v2690 = vunpack.c.h.b16 %v2534
    %v2691 = vunpack.c.l.b16 %v2535
    %v2692 = vunpack.c.h.b16 %v2535
    %v2693 = vunpack.c.l.b16 %v2536
    %v2694 = vunpack.c.h.b16 %v2536
    %v2695 = vunpack.c.l.b16 %v2537
    %v2696 = vunpack.c.h.b16 %v2537
    %v2697 = vunpack.c.l.b16 %v2538
    %v2698 = vunpack.c.h.b16 %v2538
    %v2699 = vunpack.c.l.b16 %v2539
    %v2700 = vunpack.c.h.b16 %v2539
    %v2701 = vunpack.c.l.b16 %v2540
    %v2702 = vunpack.c.h.b16 %v2540
    %v2703 = vunpack.c.l.b16 %v2541
    %v2704 = vunpack.c.h.b16 %v2541
    %v2705 = vunpack.c.l.b16 %v2542
    %v2706 = vunpack.c.h.b16 %v2542
    %v2707 = vunpack.c.l.b16 %v2543
    %v2708 = vunpack.c.h.b16 %v2543
    %v2709 = vunpack.c.l.b16 %v2544
    %v2710 = vunpack.c.h.b16 %v2544
    %v2711 = vunpack.c.l.b16 %v2545
    %v2712 = vunpack.c.h.b16 %v2545
    %v2713 = vunpack.c.l.b16 %v2546
    %v2714 = vunpack.c.h.b16 %v2546
    %v2715 = vunpack.c.l.b16 %v2547
    %v2716 = vunpack.c.h.b16 %v2547
    %v2717 = vunpack.c.l.b16 %v2548
    %v2718 = vunpack.c.h.b16 %v2548
    %v2719 = vunpack.c.l.b16 %v2549
    %v2720 = vunpack.c.h.b16 %v2549
    %v2721 = vunpack.c.l.b16 %v2550
    %v2722 = vunpack.c.h.b16 %v2550
    %v2723 = vunpack.c.l.b16 %v2551
    %v2724 = vunpack.c.h.b16 %v2551
    %v2725 = vunpack.c.l.b16 %v2552
    %v2726 = vunpack.c.h.b16 %v2552
    %v2727 = vunpack.c.l.b16 %v2553
    %v2728 = vunpack.c.h.b16 %v2553
    %v2729 = vunpack.c.l.b16 %v2554
    %v2730 = vunpack.c.h.b16 %v2554
    %v2731 = vunpack.c.l.b16 %v2555
    %v2732 = vunpack.c.h.b16 %v2555
    %v2733 = vunpack.c.l.b16 %v2556
    %v2734 = vunpack.c.h.b16 %v2556
    %v2735 = vunpack.c.l.b16 %v2557
    %v2736 = vunpack.c.h.b16 %v2557
    %v2737 = vunpack.c.l.b16 %v2558
    %v2738 = vunpack.c.h.b16 %v2558
    %v2739 = vunpack.c.l.b16 %v2559
    %v2740 = vunpack.c.h.b16 %v2559
    %v2741 = vunpack.c.l.b16 %v2560
    %v2742 = vunpack.c.h.b16 %v2560
    %v2743 = vunpack.c.l.b16 %v2561
    %v2744 = vunpack.c.h.b16 %v2561
    %v2745 = vunpack.c.l.b16 %v2562
    %v2746 = vunpack.c.h.b16 %v2562
    %v2747 = vunpack.c.l.b16 %v2563
    %v2748 = vunpack.c.h.b16 %v2563
    %v2749 = vunpack.c.l.b16 %v2564
    %v2750 = vunpack.c.h.b16 %v2564
    %v2751 = vunpack.c.l.b16 %v2565
    %v2752 = vunpack.c.h.b16 %v2565
    %v2753 = vunpack.c.l.b16 %v2566
    %v2754 = vunpack.c.h.b16 %v2566
    %v2755 = vunpack.c.l.b16 %v2567
    %v2756 = vunpack.c.h.b16 %v2567
    %v2757 = vunpack.c.l.b16 %v2568
    %v2758 = vunpack.c.h.b16 %v2568
    %v2759 = vunpack.c.l.b16 %v2569
    %v2760 = vunpack.c.h.b16 %v2569
    %v2761 = vunpack.c.l.b16 %v2570
    %v2762 = vunpack.c.h.b16 %v2570
    %v2763 = vpack.c.b16 %v2637, %v2635
    %v2764 = vpack.c.b16 %v2638, %v2636
    %v2765 = vpack.c.b16 %v2641, %v2639
    %v2766 = vpack.c.b16 %v2642, %v2640
    %v2767 = vpack.c.b16 %v2645, %v2643
    %v2768 = vpack.c.b16 %v2646, %v2644
    %v2769 = vpack.c.b16 %v2649, %v2647
    %v2770 = vpack.c.b16 %v2650, %v2648
    %v2771 = vpack.c.b16 %v2653, %v2651
    %v2772 = vpack.c.b16 %v2654, %v2652
    %v2773 = vpack.c.b16 %v2657, %v2655
    %v2774 = vpack.c.b16 %v2658, %v2656
    %v2775 = vpack.c.b16 %v2661, %v2659
    %v2776 = vpack.c.b16 %v2662, %v2660
    %v2777 = vpack.c.b16 %v2665, %v2663
    %v2778 = vpack.c.b16 %v2666, %v2664
    %v2779 = vpack.c.b16 %v2669, %v2667
    %v2780 = vpack.c.b16 %v2670, %v2668
    %v2781 = vpack.c.b16 %v2673, %v2671
    %v2782 = vpack.c.b16 %v2674, %v2672
    %v2783 = vpack.c.b16 %v2677, %v2675
    %v2784 = vpack.c.b16 %v2678, %v2676
    %v2785 = vpack.c.b16 %v2681, %v2679
    %v2786 = vpack.c.b16 %v2682, %v2680
    %v2787 = vpack.c.b16 %v2685, %v2683
    %v2788 = vpack.c.b16 %v2686, %v2684
    %v2789 = vpack.c.b16 %v2689, %v2687
    %v2790 = vpack.c.b16 %v2690, %v2688
    %v2791 = vpack.c.b16 %v2693, %v2691
    %v2792 = vpack.c.b16 %v2694, %v2692
    %v2793 = vpack.c.b16 %v2697, %v2695
    %v2794 = vpack.c.b16 %v2698, %v2696
    %v2795 = vpack.c.b16 %v2701, %v2699
    %v2796 = vpack.c.b16 %v2702, %v2700
    %v2797 = vpack.c.b16 %v2705, %v2703
    %v2798 = vpack.c.b16 %v2706, %v2704
    %v2799 = vpack.c.b16 %v2709, %v2707
    %v2800 = vpack.c.b16 %v2710, %v2708
    %v2801 = vpack.c.b16 %v2713, %v2711
    %v2802 = vpack.c.b16 %v2714, %v2712
    %v2803 = vpack.c.b16 %v2717, %v2715
    %v2804 = vpack.c.b16 %v2718, %v2716
    %v2805 = vpack.c.b16 %v2721, %v2719
    %v2806 = vpack.c.b16 %v2722, %v2720
    %v2807 = vpack.c.b16 %v2725, %v2723
    %v2808 = vpack.c.b16 %v2726, %v2724
    %v2809 = vpack.c.b16 %v2729, %v2727
    %v2810 = vpack.c.b16 %v2730, %v2728
    %v2811 = vpack.c.b16 %v2733, %v2731
    %v2812 = vpack.c.b16 %v2734, %v2732
    %v2813 = vpack.c.b16 %v2737, %v2735
    %v2814 = vpack.c.b16 %v2738, %v2736
    %v2815 = vpack.c.b16 %v2741, %v2739
    %v2816 = vpack.c.b16 %v2742, %v2740
    %v2817 = vpack.c.b16 %v2745, %v2743
    %v2818 = vpack.c.b16 %v2746, %v2744
    %v2819 = vpack.c.b16 %v2749, %v2747
    %v2820 = vpack.c.b16 %v2750, %v2748
    %v2821 = vpack.c.b16 %v2753, %v2751
    %v2822 = vpack.c.b16 %v2754, %v2752
    %v2823 = vpack.c.b16 %v2757, %v2755
    %v2824 = vpack.c.b16 %v2758, %v2756
    %v2825 = vpack.c.b16 %v2761, %v2759
    %v2826 = vpack.c.b16 %v2762, %v2760
    %2891 = vmatprep.subr.bf16.mxu0 %v2778
    %2892 = vmatpush1.bf16.msra.mxu0 %v2777
    %2893 = vmatprep.subr.bf16.mxu0 %v2776
    %2894 = vmatpush1.bf16.msra.mxu0 %v2775
    %2895 = vmatprep.subr.bf16.mxu0 %v2774
    %2896 = vmatpush1.bf16.msra.mxu0 %v2773
    %2897 = vmatprep.subr.bf16.mxu0 %v2772
    %2898 = vmatpush1.bf16.msra.mxu0 %v2771
    %2899 = vmatprep.subr.bf16.mxu0 %v2770
    %2900 = vmatpush1.bf16.msra.mxu0 %v2769
    %2901 = vmatprep.subr.bf16.mxu0 %v2768
    %2902 = vmatpush1.bf16.msra.mxu0 %v2767
    %2903 = vmatprep.subr.bf16.mxu0 %v2766
    %2904 = vmatpush1.bf16.msra.mxu0 %v2765
    %2905 = vmatprep.subr.bf16.mxu0 %v2764
    %2906 = vmatpush1.bf16.msra.mxu0 %v2763
    %2907 = vmatprep.subr.bf16.mxu0 %v2794
    %2908 = vmatpush2.bf16.msra.mxu0 %v2793
    %2909 = vmatprep.subr.bf16.mxu0 %v2792
    %2910 = vmatpush2.bf16.msra.mxu0 %v2791
    %2911 = vmatprep.subr.bf16.mxu0 %v2790
    %2912 = vmatpush2.bf16.msra.mxu0 %v2789
    %2913 = vmatprep.subr.bf16.mxu0 %v2788
    %2914 = vmatpush2.bf16.msra.mxu0 %v2787
    %2915 = vmatprep.subr.bf16.mxu0 %v2786
    %2916 = vmatpush2.bf16.msra.mxu0 %v2785
    %2917 = vmatprep.subr.bf16.mxu0 %v2784
    %2918 = vmatpush2.bf16.msra.mxu0 %v2783
    %2919 = vmatprep.subr.bf16.mxu0 %v2782
    %2920 = vmatpush2.bf16.msra.mxu0 %v2781
    %2921 = vmatprep.subr.bf16.mxu0 %v2780
    %2922 = vmatpush2.bf16.msra.mxu0 %v2779
    %2923 = vmatprep.mubr.bf16.mxu0 %v2482
    %2924 = vmatmul.mubr.bf16.gmra.mxu0 %v2479
    %v2925 = vpop.f32.mrf.mxu0
    %v2926 = vadd.f32 0.0, %v2925
    %v2927 = vpop.f32.mrf.mxu0
    %v2928 = vadd.f32 0.0, %v2927
    %v2929 = vpop.f32.mrf.mxu0
    %v2930 = vadd.f32 0.0, %v2929
    %v2931 = vpop.f32.mrf.mxu0
    %v2932 = vadd.f32 0.0, %v2931
    %2933 = vdwg.mxu0
    %2934 = vmatprep.subr.bf16.mxu0 %v2810
    %2935 = vmatpush1.bf16.msra.mxu0 %v2809
    %2936 = vmatprep.subr.bf16.mxu0 %v2808
    %2937 = vmatpush1.bf16.msra.mxu0 %v2807
    %2938 = vmatprep.subr.bf16.mxu0 %v2806
    %2939 = vmatpush1.bf16.msra.mxu0 %v2805
    %2940 = vmatprep.subr.bf16.mxu0 %v2804
    %2941 = vmatpush1.bf16.msra.mxu0 %v2803
    %2942 = vmatprep.subr.bf16.mxu0 %v2802
    %2943 = vmatpush1.bf16.msra.mxu0 %v2801
    %2944 = vmatprep.subr.bf16.mxu0 %v2800
    %2945 = vmatpush1.bf16.msra.mxu0 %v2799
    %2946 = vmatprep.subr.bf16.mxu0 %v2798
    %2947 = vmatpush1.bf16.msra.mxu0 %v2797
    %2948 = vmatprep.subr.bf16.mxu0 %v2796
    %2949 = vmatpush1.bf16.msra.mxu0 %v2795
    %2950 = vmatprep.subr.bf16.mxu0 %v2826
    %2951 = vmatpush2.bf16.msra.mxu0 %v2825
    %2952 = vmatprep.subr.bf16.mxu0 %v2824
    %2953 = vmatpush2.bf16.msra.mxu0 %v2823
    %2954 = vmatprep.subr.bf16.mxu0 %v2822
    %2955 = vmatpush2.bf16.msra.mxu0 %v2821
    %2956 = vmatprep.subr.bf16.mxu0 %v2820
    %2957 = vmatpush2.bf16.msra.mxu0 %v2819
    %2958 = vmatprep.subr.bf16.mxu0 %v2818
    %2959 = vmatpush2.bf16.msra.mxu0 %v2817
    %2960 = vmatprep.subr.bf16.mxu0 %v2816
    %2961 = vmatpush2.bf16.msra.mxu0 %v2815
    %2962 = vmatprep.subr.bf16.mxu0 %v2814
    %2963 = vmatpush2.bf16.msra.mxu0 %v2813
    %2964 = vmatprep.subr.bf16.mxu0 %v2812
    %2965 = vmatpush2.bf16.msra.mxu0 %v2811
    %2966 = vmatprep.mubr.bf16.mxu0 %v2488
    %2967 = vmatmul.mubr.bf16.gmra.mxu0 %v2485
    %v2968 = vpop.f32.mrf.mxu0
    %v2969 = vadd.f32 %v2926, %v2968
    %v2970 = vpop.f32.mrf.mxu0
    %v2971 = vadd.f32 %v2928, %v2970
    %v2972 = vpop.f32.mrf.mxu0
    %v2973 = vadd.f32 %v2930, %v2972
    %v2974 = vpop.f32.mrf.mxu0
    %v2975 = vadd.f32 %v2932, %v2974
    %2976 = vdwg.mxu0
    %v2977 = vrcp.pop %v2501
    %v2978 = vrcp.pop %v2506
    %v2979 = vmul.f32 %v2969, %v2977
    %v2980 = vmul.f32 %v2971, %v2977
    %v2981 = vmul.f32 %v2973, %v2978
    %v2982 = vmul.f32 %v2975, %v2978
    %v2983 = vld [vmem:[%s6] sm:$0x3]
    %v2985 = vlaneseq
    %v2986 = vshrl.u32 %v2985, 7
    %v2987 = vsub.s32 0, %v2986
    %v2988 = vrot.slane %v2983, %v2987
    %v2989 = vlaneseq
    %v2990 = vshrl.u32 %v2989, 7
    %v2991 = vsub.s32 1, %v2990
    %v2992 = vrot.slane %v2983, %v2991
    %v2995 = vadd.f32 %v2979, %v2988
    %v2996 = vadd.f32 %v2980, %v2992
    %v2997 = vadd.f32 %v2981, %v2988
    %v2998 = vadd.f32 %v2982, %v2992
    %v2999 = vmax.f32 %v2995, %v2996
    %3000 = vmax.xlane.f32.xlu0 %v2999
    %v3001 = vpop.xlane.xlu0 %3000
    %v3002 = vmax.f32 %v2997, %v2998
    %3003 = vmax.xlane.f32.xlu0 %v3002
    %v3004 = vpop.xlane.xlu0 %3003
    %v3005 = vsub.f32 %v2995, %v3001
    %v3006 = vsub.f32 %v2996, %v3001
    %v3007 = vsub.f32 %v2997, %v3004
    %v3008 = vsub.f32 %v2998, %v3004
    %v3009 = vpack.c.bf16 %v3007, %v3005
    %v3010 = vpack.c.bf16 %v3008, %v3006
    %v3012 = vmul.bf16 %v3009, 1069105081
    %v3013 = vpow.bf16.pop %v3012
    %v3015 = vmul.bf16 %v3010, 1069105081
    %v3016 = vpow.bf16.pop %v3015
    %v3017 = vunpack.c.l.bf16 %v3013
    %v3018 = vunpack.c.l.bf16 %v3016
    %v3019 = vunpack.c.h.bf16 %v3013
    %v3020 = vunpack.c.h.bf16 %v3016
    %v3021 = vadd.f32 %v3017, %v3018
    %3022 = vadd.xlane.f32.xlu0 %v3021
    %v3023 = vpop.xlane.xlu0 %3022
    %v3024 = vadd.f32 %v3019, %v3020
    %3025 = vadd.xlane.f32.xlu0 %v3024
    %v3026 = vpop.xlane.xlu0 %3025
    %v3027 = vld [vmem:[#allocation11] sm:$0xf]
    %v3028 = vld [vmem:[#allocation11 + $0x4] sm:$0xf]
    %v3029 = vld [vmem:[#allocation11 + $0x8] sm:$0xf]
    %v3030 = vld [vmem:[#allocation11 + $0xc] sm:$0xf]
    %v3031 = vld [vmem:[#allocation11 + $0x10] sm:$0xf]
    %v3032 = vld [vmem:[#allocation11 + $0x14] sm:$0xf]
    %v3033 = vld [vmem:[#allocation11 + $0x18] sm:$0xf]
    %v3034 = vld [vmem:[#allocation11 + $0x1c] sm:$0xf]
    %v3035 = vld [vmem:[#allocation11 + $0x20] sm:$0xf]
    %v3036 = vld [vmem:[#allocation11 + $0x24] sm:$0xf]
    %v3037 = vld [vmem:[#allocation11 + $0x28] sm:$0xf]
    %v3038 = vld [vmem:[#allocation11 + $0x2c] sm:$0xf]
    %v3039 = vld [vmem:[#allocation11 + $0x30] sm:$0xf]
    %v3040 = vld [vmem:[#allocation11 + $0x34] sm:$0xf]
    %v3041 = vld [vmem:[#allocation11 + $0x38] sm:$0xf]
    %v3042 = vld [vmem:[#allocation11 + $0x3c] sm:$0xf]
    %v3043 = vld [vmem:[#allocation11 + $0x40] sm:$0xf]
    %v3044 = vld [vmem:[#allocation11 + $0x44] sm:$0xf]
    %v3045 = vld [vmem:[#allocation11 + $0x48] sm:$0xf]
    %v3046 = vld [vmem:[#allocation11 + $0x4c] sm:$0xf]
    %v3047 = vld [vmem:[#allocation11 + $0x50] sm:$0xf]
    %v3048 = vld [vmem:[#allocation11 + $0x54] sm:$0xf]
    %v3049 = vld [vmem:[#allocation11 + $0x58] sm:$0xf]
    %v3050 = vld [vmem:[#allocation11 + $0x5c] sm:$0xf]
    %v3051 = vld [vmem:[#allocation11 + $0x60] sm:$0xf]
    %v3052 = vld [vmem:[#allocation11 + $0x64] sm:$0xf]
    %v3053 = vld [vmem:[#allocation11 + $0x68] sm:$0xf]
    %v3054 = vld [vmem:[#allocation11 + $0x6c] sm:$0xf]
    %v3055 = vld [vmem:[#allocation11 + $0x70] sm:$0xf]
    %v3056 = vld [vmem:[#allocation11 + $0x74] sm:$0xf]
    %v3057 = vld [vmem:[#allocation11 + $0x78] sm:$0xf]
    %v3058 = vld [vmem:[#allocation11 + $0x7c] sm:$0xf]
    %v3091 = vunpack.c.l.b16 %v3027
    %v3092 = vunpack.c.l.b16 %v3028
    %v3093 = vunpack.c.l.b16 %v3029
    %v3094 = vunpack.c.l.b16 %v3030
    %v3095 = vunpack.c.l.b16 %v3031
    %v3096 = vunpack.c.l.b16 %v3032
    %v3097 = vunpack.c.l.b16 %v3033
    %v3098 = vunpack.c.l.b16 %v3034
    %v3099 = vunpack.c.l.b16 %v3035
    %v3100 = vunpack.c.l.b16 %v3036
    %v3101 = vunpack.c.l.b16 %v3037
    %v3102 = vunpack.c.l.b16 %v3038
    %v3103 = vunpack.c.l.b16 %v3039
    %v3104 = vunpack.c.l.b16 %v3040
    %v3105 = vunpack.c.l.b16 %v3041
    %v3106 = vunpack.c.l.b16 %v3042
    %v3107 = vunpack.c.l.b16 %v3043
    %v3108 = vunpack.c.l.b16 %v3044
    %v3109 = vunpack.c.l.b16 %v3045
    %v3110 = vunpack.c.l.b16 %v3046
    %v3111 = vunpack.c.l.b16 %v3047
    %v3112 = vunpack.c.l.b16 %v3048
    %v3113 = vunpack.c.l.b16 %v3049
    %v3114 = vunpack.c.l.b16 %v3050
    %v3115 = vunpack.c.l.b16 %v3051
    %v3116 = vunpack.c.l.b16 %v3052
    %v3117 = vunpack.c.l.b16 %v3053
    %v3118 = vunpack.c.l.b16 %v3054
    %v3119 = vunpack.c.l.b16 %v3055
    %v3120 = vunpack.c.l.b16 %v3056
    %v3121 = vunpack.c.l.b16 %v3057
    %v3122 = vunpack.c.l.b16 %v3058
    %v3123 = vpack.c.b16 %v3092, %v3091
    %v3124 = vpack.c.b16 %v3094, %v3093
    %v3125 = vpack.c.b16 %v3096, %v3095
    %v3126 = vpack.c.b16 %v3098, %v3097
    %v3127 = vpack.c.b16 %v3100, %v3099
    %v3128 = vpack.c.b16 %v3102, %v3101
    %v3129 = vpack.c.b16 %v3104, %v3103
    %v3130 = vpack.c.b16 %v3106, %v3105
    %v3131 = vpack.c.b16 %v3108, %v3107
    %v3132 = vpack.c.b16 %v3110, %v3109
    %v3133 = vpack.c.b16 %v3112, %v3111
    %v3134 = vpack.c.b16 %v3114, %v3113
    %v3135 = vpack.c.b16 %v3116, %v3115
    %v3136 = vpack.c.b16 %v3118, %v3117
    %v3137 = vpack.c.b16 %v3120, %v3119
    %v3138 = vpack.c.b16 %v3122, %v3121
    %3155 = vmatprep.subr.bf16.mxu0 0
    %3156 = vmatpush1.bf16.msra.mxu0 %v3130
    %3157 = vmatprep.subr.bf16.mxu0 0
    %3158 = vmatpush1.bf16.msra.mxu0 %v3129
    %3159 = vmatprep.subr.bf16.mxu0 0
    %3160 = vmatpush1.bf16.msra.mxu0 %v3128
    %3161 = vmatprep.subr.bf16.mxu0 0
    %3162 = vmatpush1.bf16.msra.mxu0 %v3127
    %3163 = vmatprep.subr.bf16.mxu0 0
    %3164 = vmatpush1.bf16.msra.mxu0 %v3126
    %3165 = vmatprep.subr.bf16.mxu0 0
    %3166 = vmatpush1.bf16.msra.mxu0 %v3125
    %3167 = vmatprep.subr.bf16.mxu0 0
    %3168 = vmatpush1.bf16.msra.mxu0 %v3124
    %3169 = vmatprep.subr.bf16.mxu0 0
    %3170 = vmatpush1.bf16.msra.mxu0 %v3123
    %3171 = vmatprep.subr.bf16.mxu0 0
    %3172 = vmatpush2.bf16.msra.mxu0 %v3138
    %3173 = vmatprep.subr.bf16.mxu0 0
    %3174 = vmatpush2.bf16.msra.mxu0 %v3137
    %3175 = vmatprep.subr.bf16.mxu0 0
    %3176 = vmatpush2.bf16.msra.mxu0 %v3136
    %3177 = vmatprep.subr.bf16.mxu0 0
    %3178 = vmatpush2.bf16.msra.mxu0 %v3135
    %3179 = vmatprep.subr.bf16.mxu0 0
    %3180 = vmatpush2.bf16.msra.mxu0 %v3134
    %3181 = vmatprep.subr.bf16.mxu0 0
    %3182 = vmatpush2.bf16.msra.mxu0 %v3133
    %3183 = vmatprep.subr.bf16.mxu0 0
    %3184 = vmatpush2.bf16.msra.mxu0 %v3132
    %3185 = vmatprep.subr.bf16.mxu0 0
    %3186 = vmatpush2.bf16.msra.mxu0 %v3131
    %3187 = vmatprep.mubr.bf16.mxu0 %v3016
    %3188 = vmatmul.mubr.bf16.gmra.mxu0 %v3013
    %v3189 = vpop.f32.mrf.mxu0
    %v3190 = vadd.f32 0.0, %v3189
    %v3191 = vpop.f32.mrf.mxu0
    %v3192 = vpop.f32.mrf.mxu0
    %v3193 = vadd.f32 0.0, %v3192
    %v3194 = vpop.f32.mrf.mxu0
    %3195 = vdwg.mxu0
    %v3196 = vrcp.pop %v3023
    %v3197 = vrcp.pop %v3026
    %v3198 = vmul.f32 %v3190, %v3196
    %v3199 = vmul.f32 %v3193, %v3197
    %v3200 = vld [vmem:[%s8] sm:$0x1]
    %v3202 = vlaneseq
    %v3203 = vshrl.u32 %v3202, 7
    %v3204 = vsub.s32 0, %v3203
    %v3205 = vrot.slane %v3200, %v3204
    %v3207 = vadd.f32 %v3198, %v3205
    %v3208 = vadd.f32 %v3199, %v3205
    %3209 = vst [vmem:[#allocation13] sm:$0xff] %v3207
    %3210 = vst [vmem:[#allocation13 + $0x8] sm:$0xff] %v3208
    // Predicated region
    $region62: #{tpu_custom_call.1} parent=1 // pred_check
      _
    $region63: #{tpu_custom_call.1} parent=1 // pred_check_branch
      %3212 = sbr.rel (0) target = $region65
    $region64: #{tpu_custom_call.1} parent=1 // pred_region
      %s3214 = ssub.s32 256, 256
      %3215 = vsyncadd [#allocation4], %s3214
      %s3216 = sshll.u32 [#allocation13], 4
      %s3217 = int_to_ptr.vmem [resolvable:$true] %s3216
      %3222 = dma.vmem_to_hbm [thread:$0]  %s3217, 256, %s9, [#allocation4], 128, 128, 8
    $region65: #{tpu_custom_call.1} parent=1 // pred_fallthru
      _
    // Predicated region
    $region66: #{tpu_custom_call.1} parent=1 // pred_check
      _
    $region67: #{tpu_custom_call.1} parent=1 // pred_check_branch
      %3224 = sbr.rel (0) target = $region69
    $region68: #{tpu_custom_call.1} parent=1 // pred_region
      %3225 = dma.done [#allocation4], 256
    $region69: #{tpu_custom_call.1} parent=1 // pred_fallthru
      _
    %3226 = vsyncpa [#allocation3], 1
    %3227 = vsyncpa [#allocation6], 1
    %3228 = vsyncpa [#allocation9], 1
    %3229 = vsyncpa [#allocation12], 1
    %3230 = vsyncpa [#allocation4], 1

</llo_original>
